<compile_context>
chip_gen: v7x
topology: tpu7x:2x2x1
jax: 0.10.0
libtpu: 0.0.40
codegen_flags: <defaults>
</compile_context>

<pallas_src>
import jax
import jax.numpy as jnp
from jax import lax
from jax.experimental import pallas as pl
from jax.experimental.pallas import tpu as pltpu


def _leaky_relu(x):
    # torch.nn.LeakyReLU default negative_slope = 0.01
    return jnp.where(x >= 0.0, x, 0.01 * x)


# --------------------------------------------------------------------------
# Kernel A: the four GCN propagation layers (gridless; graph propagation is
# all-to-all so the whole N x N adjacency stays resident).
# Outputs: packed (N, 4E) slab [out1 | out2 | in1 | in2], plus dec = out2 @ W_d^T
# and in2 as standalone (N, E) arrays consumed by the edge kernel.
# --------------------------------------------------------------------------
def gglr_prop_kernel(p_ref, q_ref, adj_ref,
                     w_og1_ref, b_og1_ref, w_og2_ref, b_og2_ref,
                     w_ig1_ref, b_ig1_ref, w_ig2_ref, b_ig2_ref,
                     w_dec_t_ref,
                     slab_ref, dec_ref, in2_ref):
    A = adj_ref[...]                                   # (N, N)
    N = A.shape[0]

    # single binarization; all degree vectors derived from it
    no = jnp.where(A > 0.0, 1.0, 0.0).astype(jnp.float32)
    ones_col = jnp.ones((N, 1), jnp.float32)

    rowsum = jnp.sum(no, axis=1, keepdims=True)        # (N, 1) out-degree
    # column sums as a column vector via no^T @ 1 (transpose folded into MXU)
    colsum = lax.dot_general(no, ones_col,
                             dimension_numbers=(((0,), (0,)), ((), ())),
                             preferred_element_type=jnp.float32)   # (N, 1)

    inv_sqrt_c1 = lax.rsqrt(colsum + 1.0)              # GCN norm, outgoing
    inv_sqrt_r1 = lax.rsqrt(rowsum + 1.0)              # GCN norm, ingoing
    invD_out = 1.0 / (rowsum + 1e-7)                   # hoisted reciprocals
    invD_in = 1.0 / (colsum + 1e-7)

    def prop_out(x, w_ref, b_ref):
        # GCN: D~^{-1/2} (no^T + I) D~^{-1/2} (x W + b)   (no^T via dot_general)
        h = jnp.dot(x, w_ref[...], preferred_element_type=jnp.float32) + b_ref[...]
        hs = inv_sqrt_c1 * h
        g = inv_sqrt_c1 * (
            lax.dot_general(no, hs,
                            dimension_numbers=(((0,), (0,)), ((), ())),
                            preferred_element_type=jnp.float32) + hs)
        y = jnp.dot(A, g, preferred_element_type=jnp.float32) * invD_out
        return _leaky_relu(y)

    def prop_in(x, w_ref, b_ref):
        # GCN: D~^{-1/2} (no + I) D~^{-1/2} (x W + b) ; then A^T @ (.)
        h = jnp.dot(x, w_ref[...], preferred_element_type=jnp.float32) + b_ref[...]
        hs = inv_sqrt_r1 * h
        g = inv_sqrt_r1 * (
            jnp.dot(no, hs, preferred_element_type=jnp.float32) + hs)
        y = lax.dot_general(A, g,
                            dimension_numbers=(((0,), (0,)), ((), ())),
                            preferred_element_type=jnp.float32) * invD_in
        return _leaky_relu(y)

    out1 = prop_out(p_ref[...], w_og1_ref, b_og1_ref)
    out2 = prop_out(out1, w_og2_ref, b_og2_ref)
    in1 = prop_in(q_ref[...], w_ig1_ref, b_ig1_ref)
    in2 = prop_in(in1, w_ig2_ref, b_ig2_ref)

    dec = jnp.dot(out2, w_dec_t_ref[...], preferred_element_type=jnp.float32)

    # lane-dense 128-wide output slab (4 * E = 128 lanes) -> unmasked stores
    slab_ref[...] = jnp.concatenate([out1, out2, in1, in2], axis=-1)
    dec_ref[...] = dec
    in2_ref[...] = in2


# --------------------------------------------------------------------------
# Kernel B: edge reconstruction  e_hat = (dec @ in2^T) * a*exp(b*log(d)+c*d),
# row-tiled with a parallel grid axis (streams dist / e_hat, megacore on v7x).
# --------------------------------------------------------------------------
def gglr_edge_kernel(abc_ref, dec_ref, in2_ref, dist_ref, e_ref):
    a = abc_ref[0]
    b = abc_ref[1]
    c = abc_ref[2]

    dist = dist_ref[...]                               # (TR, N)
    # fused transcendental gate: a * dist**b * exp(c*dist)
    # TODO(synk): exp(b*log(dist)) requires dist > 0 (matches torch semantics
    # only for strictly positive distances).
    fx = a * jnp.exp(b * jnp.log(dist) + c * dist)

    e = lax.dot_general(dec_ref[...], in2_ref[...],
                        dimension_numbers=(((1,), (1,)), ((), ())),
                        preferred_element_type=jnp.float32)
    e_ref[...] = e * fx


def _pick_row_tile(n):
    for t in (512, 256, 128, 64, 32, 16, 8):
        if t <= n and n % t == 0:
            return t
    return n


@jax.jit
def gglr_forward(abc, p_outgoing, q_ingoing, adjacency, distance,
                 w_og1, b_og1, w_og2, b_og2,
                 w_ig1, b_ig1, w_ig2, b_ig2, w_dec_t):
    N, E = p_outgoing.shape
    f32 = jnp.float32
    vmem = pl.BlockSpec(memory_space=pltpu.MemorySpace.VMEM)
    smem = pl.BlockSpec(memory_space=pltpu.MemorySpace.SMEM)

    # ---- kernel A: propagation layers -------------------------------------
    slab, dec, in2 = pl.pallas_call(
        gglr_prop_kernel,
        out_shape=(
            jax.ShapeDtypeStruct((N, 4 * E), f32),   # [out1|out2|in1|in2]
            jax.ShapeDtypeStruct((N, E), f32),       # out2 @ W_dec^T
            jax.ShapeDtypeStruct((N, E), f32),       # in2 (for edge kernel)
        ),
        in_specs=[vmem] * 12,
        out_specs=(vmem, vmem, vmem),
        compiler_params=pltpu.CompilerParams(vmem_limit_bytes=48 << 20),
    )(p_outgoing, q_ingoing, adjacency,
      w_og1, b_og1, w_og2, b_og2, w_ig1, b_ig1, w_ig2, b_ig2, w_dec_t)

    # ---- kernel B: row-tiled edge reconstruction ---------------------------
    TR = _pick_row_tile(N)
    e_hat = pl.pallas_call(
        gglr_edge_kernel,
        out_shape=jax.ShapeDtypeStruct((N, N), f32),
        grid=(N // TR,),
        in_specs=[
            smem,                                              # abc (a,b,c)
            pl.BlockSpec((TR, E), lambda i: (i, 0)),           # dec row block
            pl.BlockSpec((N, E), lambda i: (0, 0)),            # in2 (resident)
            pl.BlockSpec((TR, N), lambda i: (i, 0)),           # dist row block
        ],
        out_specs=pl.BlockSpec((TR, N), lambda i: (i, 0)),     # e_hat rows
        compiler_params=pltpu.CompilerParams(
            dimension_semantics=("parallel",),
            vmem_limit_bytes=48 << 20),
    )(abc, dec, in2, distance)

    out1 = slab[:, 0:E]
    out2 = slab[:, E:2 * E]
    in1 = slab[:, 2 * E:3 * E]
    return out1, out2, in1, in2, e_hat


# --------------------------------------------------------------------------
# Pure-JAX reference (mirrors the PyTorch forward).
# --------------------------------------------------------------------------
def _reference(abc, p, q, A, dist, w_og1, b_og1, w_og2, b_og2,
               w_ig1, b_ig1, w_ig2, b_ig2, w_dec_t):
    a, b, c = abc[0], abc[1], abc[2]
    AT = A.T
    no = (A > 0).astype(jnp.float32)
    no_t = (AT > 0).astype(jnp.float32)
    N = A.shape[0]
    eye = jnp.eye(N, dtype=jnp.float32)
    D_out = jnp.sum(no, axis=1, keepdims=True) + 1e-7
    D_in = jnp.sum(no_t, axis=1, keepdims=True) + 1e-7
    dh_o = jnp.sum(no_t, axis=1) + 1.0
    S_out = (dh_o[:, None] ** -0.5) * (no_t + eye) * (dh_o[None, :] ** -0.5)
    dh_i = jnp.sum(no, axis=1) + 1.0
    S_in = (dh_i[:, None] ** -0.5) * (no + eye) * (dh_i[None, :] ** -0.5)

    def prop(x, w, bias, S, M, D):
        return _leaky_relu((M @ (S @ (x @ w + bias))) / D)

    o1 = prop(p, w_og1, b_og1, S_out, A, D_out)
    o2 = prop(o1, w_og2, b_og2, S_out, A, D_out)
    i1 = prop(q, w_ig1, b_ig1, S_in, AT, D_in)
    i2 = prop(i1, w_ig2, b_ig2, S_in, AT, D_in)
    fx = a * (dist ** b) * jnp.exp(c * dist)
    e = ((o2 @ w_dec_t) @ i2.T) * fx
    return o1, o2, i1, i2, e


if __name__ == "__main__":
    N, E = 64, 32  # nodes, embed_dim (small synthetic graph)
    key = jax.random.PRNGKey(0)
    ks = jax.random.split(key, 12)

    p_outgoing = jax.random.normal(ks[0], (N, E), jnp.float32)
    q_ingoing = jax.random.normal(ks[1], (N, E), jnp.float32)
    # sparse-ish nonnegative adjacency
    adj_raw = jax.random.uniform(ks[2], (N, N), jnp.float32)
    mask = (jax.random.uniform(ks[3], (N, N), jnp.float32) < 0.2)
    adjacency = jnp.where(mask, adj_raw, 0.0)
    # strictly positive distances (see TODO about dist**b)
    distance = jax.random.uniform(ks[4], (N, N), jnp.float32,
                                  minval=0.1, maxval=2.0)

    # parameters (deterministic synthetic init; matches __init__ shapes)
    abc = jnp.array([0.5, -0.25, 0.3], jnp.float32)        # a, b, c ~ U(-1,1)

    def winit(k):
        return jax.random.uniform(k, (E, E), jnp.float32, -0.2, 0.2)

    w_og1, w_og2 = winit(ks[5]), winit(ks[6])
    w_ig1, w_ig2 = winit(ks[7]), winit(ks[8])
    b_og1 = jax.random.uniform(ks[9], (1, E), jnp.float32, -0.1, 0.1)
    b_og2 = jax.random.uniform(ks[10], (1, E), jnp.float32, -0.1, 0.1)
    b_ig1 = jnp.zeros((1, E), jnp.float32)
    b_ig2 = jnp.zeros((1, E), jnp.float32)
    # decode_layer: Linear(E, E, bias=False); pass W^T so kernel does x @ W^T
    w_dec = jax.random.uniform(ks[11], (E, E), jnp.float32, -0.2, 0.2)
    w_dec_t = w_dec.T

    args = (abc, p_outgoing, q_ingoing, adjacency, distance,
            w_og1, b_og1, w_og2, b_og2, w_ig1, b_ig1, w_ig2, b_ig2, w_dec_t)

    outs = gglr_forward(*args)
    outs = jax.block_until_ready(outs)

    refs = _reference(*args)
    for got, want in zip(outs, refs):
        assert jnp.allclose(got, want, rtol=1e-4, atol=1e-4), "mismatch vs ref"

    print("KERNEL_OK")
</pallas_src>

<mosaic_0001>
module attributes {stable_mosaic.version = 11 : i64} {
  func.func @gglr_prop_kernel(%arg0: memref<64x32xf32, #tpu.memory_space<vmem>>, %arg1: memref<64x32xf32, #tpu.memory_space<vmem>>, %arg2: memref<64x64xf32, #tpu.memory_space<vmem>>, %arg3: memref<32x32xf32, #tpu.memory_space<vmem>>, %arg4: memref<1x32xf32, #tpu.memory_space<vmem>>, %arg5: memref<32x32xf32, #tpu.memory_space<vmem>>, %arg6: memref<1x32xf32, #tpu.memory_space<vmem>>, %arg7: memref<32x32xf32, #tpu.memory_space<vmem>>, %arg8: memref<1x32xf32, #tpu.memory_space<vmem>>, %arg9: memref<32x32xf32, #tpu.memory_space<vmem>>, %arg10: memref<1x32xf32, #tpu.memory_space<vmem>>, %arg11: memref<32x32xf32, #tpu.memory_space<vmem>>, %arg12: memref<64x128xf32, #tpu.memory_space<vmem>>, %arg13: memref<64x32xf32, #tpu.memory_space<vmem>>, %arg14: memref<64x32xf32, #tpu.memory_space<vmem>>) attributes {dimension_semantics = [], scalar_prefetch = 0 : i64, scratch_operands = 0 : i64, tpu.core_type = #tpu.core_type<tc>} {
    %c0 = arith.constant 0 : index
    %c0_0 = arith.constant 0 : index
    %0 = vector.load %arg2[%c0, %c0_0] : memref<64x64xf32, #tpu.memory_space<vmem>>, vector<64x64xf32>
    %cst = arith.constant 0.000000e+00 : f32
    %1 = vector.broadcast %cst : f32 to vector<64x64xf32>
    %2 = arith.cmpf ogt, %0, %1 : vector<64x64xf32>
    %cst_1 = arith.constant 1.000000e+00 : f32
    %cst_2 = arith.constant 0.000000e+00 : f32
    %3 = vector.broadcast %cst_1 : f32 to vector<64x64xf32>
    %4 = vector.broadcast %cst_2 : f32 to vector<64x64xf32>
    %5 = arith.select %2, %3, %4 : vector<64x64xi1>, vector<64x64xf32>
    %cst_3 = arith.constant 1.000000e+00 : f32
    %6 = vector.broadcast %cst_3 : f32 to vector<64x1xf32>
    %cst_4 = arith.constant dense<0.000000e+00> : vector<64xf32>
    %7 = vector.multi_reduction <add>, %5, %cst_4 [1] : vector<64x64xf32> to vector<64xf32>
    %8 = vector.shape_cast %7 : vector<64xf32> to vector<64x1xf32>
    %cst_5 = arith.constant dense<0.000000e+00> : vector<64x1xf32>
    %9 = tpu.matmul %5, %6, %cst_5 {dimension_numbers = #tpu.dot_dimension_numbers<[0], [0], [1], [1], [0, 1, 1, 1], [], []>} : vector<64x64xf32>, vector<64x1xf32>, vector<64x1xf32> -> vector<64x1xf32>
    %cst_6 = arith.constant 1.000000e+00 : f32
    %10 = vector.broadcast %cst_6 : f32 to vector<64x1xf32>
    %11 = arith.addf %9, %10 : vector<64x1xf32>
    %12 = math.rsqrt %11 : vector<64x1xf32>
    %cst_7 = arith.constant 1.000000e+00 : f32
    %13 = vector.broadcast %cst_7 : f32 to vector<64x1xf32>
    %14 = arith.addf %8, %13 : vector<64x1xf32>
    %15 = math.rsqrt %14 : vector<64x1xf32>
    %cst_8 = arith.constant 1.000000e-07 : f32
    %16 = vector.broadcast %cst_8 : f32 to vector<64x1xf32>
    %17 = arith.addf %8, %16 : vector<64x1xf32>
    %cst_9 = arith.constant 1.000000e+00 : f32
    %18 = vector.broadcast %cst_9 : f32 to vector<64x1xf32>
    %19 = arith.divf %18, %17 : vector<64x1xf32>
    %cst_10 = arith.constant 1.000000e-07 : f32
    %20 = vector.broadcast %cst_10 : f32 to vector<64x1xf32>
    %21 = arith.addf %9, %20 : vector<64x1xf32>
    %cst_11 = arith.constant 1.000000e+00 : f32
    %22 = vector.broadcast %cst_11 : f32 to vector<64x1xf32>
    %23 = arith.divf %22, %21 : vector<64x1xf32>
    %c0_12 = arith.constant 0 : index
    %c0_13 = arith.constant 0 : index
    %24 = vector.load %arg0[%c0_12, %c0_13] : memref<64x32xf32, #tpu.memory_space<vmem>>, vector<64x32xf32>
    %c0_14 = arith.constant 0 : index
    %c0_15 = arith.constant 0 : index
    %25 = vector.load %arg3[%c0_14, %c0_15] : memref<32x32xf32, #tpu.memory_space<vmem>>, vector<32x32xf32>
    %cst_16 = arith.constant dense<0.000000e+00> : vector<64x32xf32>
    %26 = tpu.matmul %24, %25, %cst_16 {dimension_numbers = #tpu.dot_dimension_numbers<[1], [0], [0], [1], [0, 0, 1, 1], [], []>} : vector<64x32xf32>, vector<32x32xf32>, vector<64x32xf32> -> vector<64x32xf32>
    %c0_17 = arith.constant 0 : index
    %c0_18 = arith.constant 0 : index
    %27 = vector.load %arg4[%c0_17, %c0_18] : memref<1x32xf32, #tpu.memory_space<vmem>>, vector<1x32xf32>
    %28 = vector.broadcast %27 : vector<1x32xf32> to vector<64x32xf32>
    %29 = arith.addf %26, %28 : vector<64x32xf32>
    %30 = vector.broadcast %12 : vector<64x1xf32> to vector<64x32xf32>
    %31 = arith.mulf %30, %29 : vector<64x32xf32>
    %cst_19 = arith.constant dense<0.000000e+00> : vector<64x32xf32>
    %32 = tpu.matmul %5, %31, %cst_19 {dimension_numbers = #tpu.dot_dimension_numbers<[0], [0], [1], [1], [0, 1, 1, 1], [], []>} : vector<64x64xf32>, vector<64x32xf32>, vector<64x32xf32> -> vector<64x32xf32>
    %33 = arith.addf %32, %31 : vector<64x32xf32>
    %34 = vector.broadcast %12 : vector<64x1xf32> to vector<64x32xf32>
    %35 = arith.mulf %34, %33 : vector<64x32xf32>
    %cst_20 = arith.constant dense<0.000000e+00> : vector<64x32xf32>
    %36 = tpu.matmul %0, %35, %cst_20 {dimension_numbers = #tpu.dot_dimension_numbers<[1], [0], [0], [1], [0, 0, 1, 1], [], []>} : vector<64x64xf32>, vector<64x32xf32>, vector<64x32xf32> -> vector<64x32xf32>
    %37 = vector.broadcast %19 : vector<64x1xf32> to vector<64x32xf32>
    %38 = arith.mulf %36, %37 : vector<64x32xf32>
    %cst_21 = arith.constant 0.000000e+00 : f32
    %39 = vector.broadcast %cst_21 : f32 to vector<64x32xf32>
    %40 = arith.cmpf oge, %38, %39 : vector<64x32xf32>
    %cst_22 = arith.constant 0.00999999977 : f32
    %41 = vector.broadcast %cst_22 : f32 to vector<64x32xf32>
    %42 = arith.mulf %41, %38 : vector<64x32xf32>
    %43 = arith.select %40, %38, %42 : vector<64x32xi1>, vector<64x32xf32>
    %c0_23 = arith.constant 0 : index
    %c0_24 = arith.constant 0 : index
    %44 = vector.load %arg5[%c0_23, %c0_24] : memref<32x32xf32, #tpu.memory_space<vmem>>, vector<32x32xf32>
    %cst_25 = arith.constant dense<0.000000e+00> : vector<64x32xf32>
    %45 = tpu.matmul %43, %44, %cst_25 {dimension_numbers = #tpu.dot_dimension_numbers<[1], [0], [0], [1], [0, 0, 1, 1], [], []>} : vector<64x32xf32>, vector<32x32xf32>, vector<64x32xf32> -> vector<64x32xf32>
    %c0_26 = arith.constant 0 : index
    %c0_27 = arith.constant 0 : index
    %46 = vector.load %arg6[%c0_26, %c0_27] : memref<1x32xf32, #tpu.memory_space<vmem>>, vector<1x32xf32>
    %47 = vector.broadcast %46 : vector<1x32xf32> to vector<64x32xf32>
    %48 = arith.addf %45, %47 : vector<64x32xf32>
    %49 = vector.broadcast %12 : vector<64x1xf32> to vector<64x32xf32>
    %50 = arith.mulf %49, %48 : vector<64x32xf32>
    %cst_28 = arith.constant dense<0.000000e+00> : vector<64x32xf32>
    %51 = tpu.matmul %5, %50, %cst_28 {dimension_numbers = #tpu.dot_dimension_numbers<[0], [0], [1], [1], [0, 1, 1, 1], [], []>} : vector<64x64xf32>, vector<64x32xf32>, vector<64x32xf32> -> vector<64x32xf32>
    %52 = arith.addf %51, %50 : vector<64x32xf32>
    %53 = vector.broadcast %12 : vector<64x1xf32> to vector<64x32xf32>
    %54 = arith.mulf %53, %52 : vector<64x32xf32>
    %cst_29 = arith.constant dense<0.000000e+00> : vector<64x32xf32>
    %55 = tpu.matmul %0, %54, %cst_29 {dimension_numbers = #tpu.dot_dimension_numbers<[1], [0], [0], [1], [0, 0, 1, 1], [], []>} : vector<64x64xf32>, vector<64x32xf32>, vector<64x32xf32> -> vector<64x32xf32>
    %56 = vector.broadcast %19 : vector<64x1xf32> to vector<64x32xf32>
    %57 = arith.mulf %55, %56 : vector<64x32xf32>
    %cst_30 = arith.constant 0.000000e+00 : f32
    %58 = vector.broadcast %cst_30 : f32 to vector<64x32xf32>
    %59 = arith.cmpf oge, %57, %58 : vector<64x32xf32>
    %cst_31 = arith.constant 0.00999999977 : f32
    %60 = vector.broadcast %cst_31 : f32 to vector<64x32xf32>
    %61 = arith.mulf %60, %57 : vector<64x32xf32>
    %62 = arith.select %59, %57, %61 : vector<64x32xi1>, vector<64x32xf32>
    %c0_32 = arith.constant 0 : index
    %c0_33 = arith.constant 0 : index
    %63 = vector.load %arg1[%c0_32, %c0_33] : memref<64x32xf32, #tpu.memory_space<vmem>>, vector<64x32xf32>
    %c0_34 = arith.constant 0 : index
    %c0_35 = arith.constant 0 : index
    %64 = vector.load %arg7[%c0_34, %c0_35] : memref<32x32xf32, #tpu.memory_space<vmem>>, vector<32x32xf32>
    %cst_36 = arith.constant dense<0.000000e+00> : vector<64x32xf32>
    %65 = tpu.matmul %63, %64, %cst_36 {dimension_numbers = #tpu.dot_dimension_numbers<[1], [0], [0], [1], [0, 0, 1, 1], [], []>} : vector<64x32xf32>, vector<32x32xf32>, vector<64x32xf32> -> vector<64x32xf32>
    %c0_37 = arith.constant 0 : index
    %c0_38 = arith.constant 0 : index
    %66 = vector.load %arg8[%c0_37, %c0_38] : memref<1x32xf32, #tpu.memory_space<vmem>>, vector<1x32xf32>
    %67 = vector.broadcast %66 : vector<1x32xf32> to vector<64x32xf32>
    %68 = arith.addf %65, %67 : vector<64x32xf32>
    %69 = vector.broadcast %15 : vector<64x1xf32> to vector<64x32xf32>
    %70 = arith.mulf %69, %68 : vector<64x32xf32>
    %cst_39 = arith.constant dense<0.000000e+00> : vector<64x32xf32>
    %71 = tpu.matmul %5, %70, %cst_39 {dimension_numbers = #tpu.dot_dimension_numbers<[1], [0], [0], [1], [0, 0, 1, 1], [], []>} : vector<64x64xf32>, vector<64x32xf32>, vector<64x32xf32> -> vector<64x32xf32>
    %72 = arith.addf %71, %70 : vector<64x32xf32>
    %73 = vector.broadcast %15 : vector<64x1xf32> to vector<64x32xf32>
    %74 = arith.mulf %73, %72 : vector<64x32xf32>
    %cst_40 = arith.constant dense<0.000000e+00> : vector<64x32xf32>
    %75 = tpu.matmul %0, %74, %cst_40 {dimension_numbers = #tpu.dot_dimension_numbers<[0], [0], [1], [1], [0, 1, 1, 1], [], []>} : vector<64x64xf32>, vector<64x32xf32>, vector<64x32xf32> -> vector<64x32xf32>
    %76 = vector.broadcast %23 : vector<64x1xf32> to vector<64x32xf32>
    %77 = arith.mulf %75, %76 : vector<64x32xf32>
    %cst_41 = arith.constant 0.000000e+00 : f32
    %78 = vector.broadcast %cst_41 : f32 to vector<64x32xf32>
    %79 = arith.cmpf oge, %77, %78 : vector<64x32xf32>
    %cst_42 = arith.constant 0.00999999977 : f32
    %80 = vector.broadcast %cst_42 : f32 to vector<64x32xf32>
    %81 = arith.mulf %80, %77 : vector<64x32xf32>
    %82 = arith.select %79, %77, %81 : vector<64x32xi1>, vector<64x32xf32>
    %c0_43 = arith.constant 0 : index
    %c0_44 = arith.constant 0 : index
    %83 = vector.load %arg9[%c0_43, %c0_44] : memref<32x32xf32, #tpu.memory_space<vmem>>, vector<32x32xf32>
    %cst_45 = arith.constant dense<0.000000e+00> : vector<64x32xf32>
    %84 = tpu.matmul %82, %83, %cst_45 {dimension_numbers = #tpu.dot_dimension_numbers<[1], [0], [0], [1], [0, 0, 1, 1], [], []>} : vector<64x32xf32>, vector<32x32xf32>, vector<64x32xf32> -> vector<64x32xf32>
    %c0_46 = arith.constant 0 : index
    %c0_47 = arith.constant 0 : index
    %85 = vector.load %arg10[%c0_46, %c0_47] : memref<1x32xf32, #tpu.memory_space<vmem>>, vector<1x32xf32>
    %86 = vector.broadcast %85 : vector<1x32xf32> to vector<64x32xf32>
    %87 = arith.addf %84, %86 : vector<64x32xf32>
    %88 = vector.broadcast %15 : vector<64x1xf32> to vector<64x32xf32>
    %89 = arith.mulf %88, %87 : vector<64x32xf32>
    %cst_48 = arith.constant dense<0.000000e+00> : vector<64x32xf32>
    %90 = tpu.matmul %5, %89, %cst_48 {dimension_numbers = #tpu.dot_dimension_numbers<[1], [0], [0], [1], [0, 0, 1, 1], [], []>} : vector<64x64xf32>, vector<64x32xf32>, vector<64x32xf32> -> vector<64x32xf32>
    %91 = arith.addf %90, %89 : vector<64x32xf32>
    %92 = vector.broadcast %15 : vector<64x1xf32> to vector<64x32xf32>
    %93 = arith.mulf %92, %91 : vector<64x32xf32>
    %cst_49 = arith.constant dense<0.000000e+00> : vector<64x32xf32>
    %94 = tpu.matmul %0, %93, %cst_49 {dimension_numbers = #tpu.dot_dimension_numbers<[0], [0], [1], [1], [0, 1, 1, 1], [], []>} : vector<64x64xf32>, vector<64x32xf32>, vector<64x32xf32> -> vector<64x32xf32>
    %95 = vector.broadcast %23 : vector<64x1xf32> to vector<64x32xf32>
    %96 = arith.mulf %94, %95 : vector<64x32xf32>
    %cst_50 = arith.constant 0.000000e+00 : f32
    %97 = vector.broadcast %cst_50 : f32 to vector<64x32xf32>
    %98 = arith.cmpf oge, %96, %97 : vector<64x32xf32>
    %cst_51 = arith.constant 0.00999999977 : f32
    %99 = vector.broadcast %cst_51 : f32 to vector<64x32xf32>
    %100 = arith.mulf %99, %96 : vector<64x32xf32>
    %101 = arith.select %98, %96, %100 : vector<64x32xi1>, vector<64x32xf32>
    %c0_52 = arith.constant 0 : index
    %c0_53 = arith.constant 0 : index
    %102 = vector.load %arg11[%c0_52, %c0_53] : memref<32x32xf32, #tpu.memory_space<vmem>>, vector<32x32xf32>
    %cst_54 = arith.constant dense<0.000000e+00> : vector<64x32xf32>
    %103 = tpu.matmul %62, %102, %cst_54 {dimension_numbers = #tpu.dot_dimension_numbers<[1], [0], [0], [1], [0, 0, 1, 1], [], []>} : vector<64x32xf32>, vector<32x32xf32>, vector<64x32xf32> -> vector<64x32xf32>
    %104 = tpu.concatenate %43, %62, %82, %101 in 1 : vector<64x32xf32>, vector<64x32xf32>, vector<64x32xf32>, vector<64x32xf32> -> vector<64x128xf32>
    %c0_55 = arith.constant 0 : index
    %c0_56 = arith.constant 0 : index
    %105 = vector.load %arg12[%c0_55, %c0_56] : memref<64x128xf32, #tpu.memory_space<vmem>>, vector<64x128xf32>
    tpu.vector_store %arg12[%c0_55, %c0_56], %104 {strides = array<i32>} : memref<64x128xf32, #tpu.memory_space<vmem>>, vector<64x128xf32>,
    %c0_57 = arith.constant 0 : index
    %c0_58 = arith.constant 0 : index
    %106 = vector.load %arg13[%c0_57, %c0_58] : memref<64x32xf32, #tpu.memory_space<vmem>>, vector<64x32xf32>
    tpu.vector_store %arg13[%c0_57, %c0_58], %103 {strides = array<i32>} : memref<64x32xf32, #tpu.memory_space<vmem>>, vector<64x32xf32>,
    %c0_59 = arith.constant 0 : index
    %c0_60 = arith.constant 0 : index
    %107 = vector.load %arg14[%c0_59, %c0_60] : memref<64x32xf32, #tpu.memory_space<vmem>>, vector<64x32xf32>
    tpu.vector_store %arg14[%c0_59, %c0_60], %101 {strides = array<i32>} : memref<64x32xf32, #tpu.memory_space<vmem>>, vector<64x32xf32>,
    return
  }
}

module attributes {stable_mosaic.version = 11 : i64} {
  func.func @gglr_edge_kernel(%arg0: i32, %arg1: memref<3xf32, #tpu.memory_space<smem>>, %arg2: memref<64x32xf32, #tpu.memory_space<vmem>>, %arg3: memref<64x32xf32, #tpu.memory_space<vmem>>, %arg4: memref<64x64xf32, #tpu.memory_space<vmem>>, %arg5: memref<64x64xf32, #tpu.memory_space<vmem>>) attributes {dimension_semantics = [#tpu.dimension_semantics<parallel>], iteration_bounds = array<i64: 1>, scalar_prefetch = 0 : i64, scratch_operands = 0 : i64, tpu.core_type = #tpu.core_type<tc>, window_params = [{transform_indices = @transform_0, window_bounds = array<i64: 3>}, {transform_indices = @transform_1, window_bounds = array<i64: 64, 32>}, {pipeline_mode = #tpu.pipeline_mode<synchronous>, transform_indices = @transform_2, window_bounds = array<i64: 64, 32>}, {transform_indices = @transform_3, window_bounds = array<i64: 64, 64>}, {transform_indices = @transform_4, window_bounds = array<i64: 64, 64>}]} {
    %c0 = arith.constant 0 : index
    %0 = memref.load %arg1[%c0] : memref<3xf32, #tpu.memory_space<smem>>
    %c1 = arith.constant 1 : index
    %1 = memref.load %arg1[%c1] : memref<3xf32, #tpu.memory_space<smem>>
    %c2 = arith.constant 2 : index
    %2 = memref.load %arg1[%c2] : memref<3xf32, #tpu.memory_space<smem>>
    %c0_0 = arith.constant 0 : index
    %c0_1 = arith.constant 0 : index
    %3 = vector.load %arg4[%c0_0, %c0_1] : memref<64x64xf32, #tpu.memory_space<vmem>>, vector<64x64xf32>
    %4 = math.log %3 : vector<64x64xf32>
    %5 = vector.broadcast %1 : f32 to vector<64x64xf32>
    %6 = arith.mulf %5, %4 : vector<64x64xf32>
    %7 = vector.broadcast %2 : f32 to vector<64x64xf32>
    %8 = arith.mulf %7, %3 : vector<64x64xf32>
    %9 = arith.addf %6, %8 : vector<64x64xf32>
    %10 = math.exp %9 : vector<64x64xf32>
    %11 = vector.broadcast %0 : f32 to vector<64x64xf32>
    %12 = arith.mulf %11, %10 : vector<64x64xf32>
    %c0_2 = arith.constant 0 : index
    %c0_3 = arith.constant 0 : index
    %13 = vector.load %arg2[%c0_2, %c0_3] : memref<64x32xf32, #tpu.memory_space<vmem>>, vector<64x32xf32>
    %c0_4 = arith.constant 0 : index
    %c0_5 = arith.constant 0 : index
    %14 = vector.load %arg3[%c0_4, %c0_5] : memref<64x32xf32, #tpu.memory_space<vmem>>, vector<64x32xf32>
    %cst = arith.constant dense<0.000000e+00> : vector<64x64xf32>
    %15 = tpu.matmul %13, %14, %cst {dimension_numbers = #tpu.dot_dimension_numbers<[1], [1], [0], [0], [0, 0, 1, 0], [], []>} : vector<64x32xf32>, vector<64x32xf32>, vector<64x64xf32> -> vector<64x64xf32>
    %16 = arith.mulf %15, %12 : vector<64x64xf32>
    %c0_6 = arith.constant 0 : index
    %c0_7 = arith.constant 0 : index
    %17 = vector.load %arg5[%c0_6, %c0_7] : memref<64x64xf32, #tpu.memory_space<vmem>>, vector<64x64xf32>
    tpu.vector_store %arg5[%c0_6, %c0_7], %16 {strides = array<i32>} : memref<64x64xf32, #tpu.memory_space<vmem>>, vector<64x64xf32>,
    return
  }
  func.func @transform_0(%arg0: i32) -> i32 {
    %c0_i32 = arith.constant 0 : i32
    %c0_i32_0 = arith.constant 0 : i32
    return %c0_i32 : i32
  }
  func.func @transform_1(%arg0: i32) -> (i32, i32) {
    %c0_i32 = arith.constant 0 : i32
    %c0_i32_0 = arith.constant 0 : i32
    return %arg0, %c0_i32 : i32, i32
  }
  func.func @transform_2(%arg0: i32) -> (i32, i32) {
    %c0_i32 = arith.constant 0 : i32
    %c0_i32_0 = arith.constant 0 : i32
    %c0_i32_1 = arith.constant 0 : i32
    return %c0_i32, %c0_i32_0 : i32, i32
  }
  func.func @transform_3(%arg0: i32) -> (i32, i32) {
    %c0_i32 = arith.constant 0 : i32
    %c0_i32_0 = arith.constant 0 : i32
    return %arg0, %c0_i32 : i32, i32
  }
  func.func @transform_4(%arg0: i32) -> (i32, i32) {
    %c0_i32 = arith.constant 0 : i32
    %c0_i32_0 = arith.constant 0 : i32
    return %arg0, %c0_i32 : i32, i32
  }
}

</mosaic_0001>

<llo_original>
// kernel: gglr_forward.3
$region0: #{gglr_forward.3}
  #allocation0 [shape = 'u32[]', space=smem, size = 0x4, offset = 0x4, fixed_abs, tag = 'smem constant byte address 0x4 - core index']
  #allocation1 [shape = 'u32[144,128]{1,0:T(1,128)}', space=vmem, size = 0x12000, scoped, tag = 'internal scratch']
  %s0 = inlined_call_operand.vmem [shape: f32[3], index: 0, kind: input, shape index: {}]
  %s1 = inlined_call_operand.vmem [shape: f32[64,32], index: 1, kind: input, shape index: {}]
  %s2 = inlined_call_operand.vmem [shape: f32[64,32], index: 2, kind: input, shape index: {}]
  %s3 = inlined_call_operand.vmem [shape: f32[64,64], index: 3, kind: input, shape index: {}]
  %s4 = inlined_call_operand.hbm [shape: f32[64,64], index: 4, kind: output, shape index: {}]
  %s5 = sld [smem:[#allocation0]]
  $region30: #{gglr_forward.3} parent=0
    _
  %s7 = ssub.s32 1, %s5
  %s8 = scalar_select 0, %s7, %s5
  $region1: #{gglr_forward.3} parent=0
    #allocation2 [shape = 'u8[512]{0}', space=smem, size = 0x200, scoped, tag = 'input window, operand 0, single buffered']
    #allocation3 [shape = 's32[1]{0}', space=sflag, size = 0x4, scoped, tag = 'scoped memory for gglr_forward.3']
    #allocation4 [shape = 's32[1]{0}', space=sflag, size = 0x4, scoped, tag = 'scoped memory for gglr_forward.3']
    #allocation5 [shape = 'u8[32768]{0}', space=vmem, size = 0x8000, scoped, tag = 'output window, operand 0, single buffered']
    %9 = vsyncpa [#allocation4], 0
    %10 = vsyncpa [#allocation3], 0
    // Predicated region
    $region2: #{gglr_forward.3} parent=1 // pred_check
      _
    $region3: #{gglr_forward.3} parent=1 // pred_check_branch
      %12 = sbr.rel (0) target = $region5
    $region4: #{gglr_forward.3} parent=1 // pred_region
      %s14 = ssub.s32 16, 16
      %15 = vsyncadd [#allocation4], %s14
      %s17 = sshll.u32 %s0, 4
      %s18 = int_to_ptr.vmem [resolvable:$true] %s17
      %20 = dma.vmem_to_smem %s18, 16, [#allocation2], [#allocation4]
    $region5: #{gglr_forward.3} parent=1 // pred_fallthru
      _
    // Predicated region
    $region6: #{gglr_forward.3} parent=1 // pred_check
      _
    $region7: #{gglr_forward.3} parent=1 // pred_check_branch
      %22 = sbr.rel (0) target = $region9
    $region8: #{gglr_forward.3} parent=1 // pred_region
      _
    $region9: #{gglr_forward.3} parent=1 // pred_fallthru
      _
    // Predicated region
    $region10: #{gglr_forward.3} parent=1 // pred_check
      _
    $region11: #{gglr_forward.3} parent=1 // pred_check_branch
      %24 = sbr.rel (0) target = $region13
    $region12: #{gglr_forward.3} parent=1 // pred_region
      _
    $region13: #{gglr_forward.3} parent=1 // pred_fallthru
      _
    // Predicated region
    $region14: #{gglr_forward.3} parent=1 // pred_check
      _
    $region15: #{gglr_forward.3} parent=1 // pred_check_branch
      %26 = sbr.rel (0) target = $region17
    $region16: #{gglr_forward.3} parent=1 // pred_region
      _
    $region17: #{gglr_forward.3} parent=1 // pred_fallthru
      _
    // Predicated region
    $region18: #{gglr_forward.3} parent=1 // pred_check
      _
    $region19: #{gglr_forward.3} parent=1 // pred_check_branch
      %28 = sbr.rel (0) target = $region21
    $region20: #{gglr_forward.3} parent=1 // pred_region
      %29 = dma.done [#allocation4], 16
    $region21: #{gglr_forward.3} parent=1 // pred_fallthru
      _
    %30 = sfence
    %s31 = sld [smem:[#allocation2]]
    %s32 = sld [smem:[#allocation2 + $0x1]]
    %s33 = sld [smem:[#allocation2 + $0x2]]
    %v34 = vld [vmem:[%s3] sm:$0xff]
    %v35 = vld [vmem:[%s3 + $0x8] sm:$0xff]
    %v36 = vld [vmem:[%s3 + $0x10] sm:$0xff]
    %v37 = vld [vmem:[%s3 + $0x18] sm:$0xff]
    %v38 = vld [vmem:[%s3 + $0x20] sm:$0xff]
    %v39 = vld [vmem:[%s3 + $0x28] sm:$0xff]
    %v40 = vld [vmem:[%s3 + $0x30] sm:$0xff]
    %v41 = vld [vmem:[%s3 + $0x38] sm:$0xff]
    %v42 = vlog2.pop %v34
    %v43 = vmul.f32 %v42, 0.6931472
    %v44 = vlog2.pop %v35
    %v45 = vmul.f32 %v44, 0.6931472
    %v46 = vlog2.pop %v36
    %v47 = vmul.f32 %v46, 0.6931472
    %v48 = vlog2.pop %v37
    %v49 = vmul.f32 %v48, 0.6931472
    %v50 = vlog2.pop %v38
    %v51 = vmul.f32 %v50, 0.6931472
    %v52 = vlog2.pop %v39
    %v53 = vmul.f32 %v52, 0.6931472
    %v54 = vlog2.pop %v40
    %v55 = vmul.f32 %v54, 0.6931472
    %v56 = vlog2.pop %v41
    %v57 = vmul.f32 %v56, 0.6931472
    %v58 = vstv %s32
    %v59 = vmul.f32 %v58, %v43
    %v60 = vmul.f32 %v58, %v45
    %v61 = vmul.f32 %v58, %v47
    %v62 = vmul.f32 %v58, %v49
    %v63 = vmul.f32 %v58, %v51
    %v64 = vmul.f32 %v58, %v53
    %v65 = vmul.f32 %v58, %v55
    %v66 = vmul.f32 %v58, %v57
    %v67 = vstv %s33
    %v68 = vmul.f32 %v67, %v34
    %v69 = vmul.f32 %v67, %v35
    %v70 = vmul.f32 %v67, %v36
    %v71 = vmul.f32 %v67, %v37
    %v72 = vmul.f32 %v67, %v38
    %v73 = vmul.f32 %v67, %v39
    %v74 = vmul.f32 %v67, %v40
    %v75 = vmul.f32 %v67, %v41
    %v76 = vadd.f32 %v59, %v68
    %v77 = vadd.f32 %v60, %v69
    %v78 = vadd.f32 %v61, %v70
    %v79 = vadd.f32 %v62, %v71
    %v80 = vadd.f32 %v63, %v72
    %v81 = vadd.f32 %v64, %v73
    %v82 = vadd.f32 %v65, %v74
    %v83 = vadd.f32 %v66, %v75
    %v84 = vmul.f32 %v76, 1.442695
    %v85 = vpow.pop %v84
    %v86 = vmul.f32 %v77, 1.442695
    %v87 = vpow.pop %v86
    %v88 = vmul.f32 %v78, 1.442695
    %v89 = vpow.pop %v88
    %v90 = vmul.f32 %v79, 1.442695
    %v91 = vpow.pop %v90
    %v92 = vmul.f32 %v80, 1.442695
    %v93 = vpow.pop %v92
    %v94 = vmul.f32 %v81, 1.442695
    %v95 = vpow.pop %v94
    %v96 = vmul.f32 %v82, 1.442695
    %v97 = vpow.pop %v96
    %v98 = vmul.f32 %v83, 1.442695
    %v99 = vpow.pop %v98
    %v100 = vstv %s31
    %v101 = vmul.f32 %v100, %v85
    %v102 = vmul.f32 %v100, %v87
    %v103 = vmul.f32 %v100, %v89
    %v104 = vmul.f32 %v100, %v91
    %v105 = vmul.f32 %v100, %v93
    %v106 = vmul.f32 %v100, %v95
    %v107 = vmul.f32 %v100, %v97
    %v108 = vmul.f32 %v100, %v99
    %v109 = vld [vmem:[%s1] sm:$0xff]
    %v110 = vld [vmem:[%s1 + $0x8] sm:$0xff]
    %v111 = vld [vmem:[%s1 + $0x10] sm:$0xff]
    %v112 = vld [vmem:[%s1 + $0x18] sm:$0xff]
    %v113 = vld [vmem:[%s1 + $0x20] sm:$0xff]
    %v114 = vld [vmem:[%s1 + $0x28] sm:$0xff]
    %v115 = vld [vmem:[%s1 + $0x30] sm:$0xff]
    %v116 = vld [vmem:[%s1 + $0x38] sm:$0xff]
    %v117 = vld [vmem:[%s2] sm:$0xff]
    %v118 = vld [vmem:[%s2 + $0x8] sm:$0xff]
    %v119 = vld [vmem:[%s2 + $0x10] sm:$0xff]
    %v120 = vld [vmem:[%s2 + $0x18] sm:$0xff]
    %v121 = vld [vmem:[%s2 + $0x20] sm:$0xff]
    %v122 = vld [vmem:[%s2 + $0x28] sm:$0xff]
    %v123 = vld [vmem:[%s2 + $0x30] sm:$0xff]
    %v124 = vld [vmem:[%s2 + $0x38] sm:$0xff]
    %vm125 = vcmask 261120
    %v127 = vsel %vm125, %v109, 0
    %v130 = vsel %vm125, %v110, 0
    %v133 = vsel %vm125, %v111, 0
    %v136 = vsel %vm125, %v112, 0
    %v139 = vsel %vm125, %v113, 0
    %v142 = vsel %vm125, %v114, 0
    %v145 = vsel %vm125, %v115, 0
    %v148 = vsel %vm125, %v116, 0
    %v151 = vsel %vm125, %v117, 0
    %v154 = vsel %vm125, %v118, 0
    %v157 = vsel %vm125, %v119, 0
    %v160 = vsel %vm125, %v120, 0
    %v163 = vsel %vm125, %v121, 0
    %v166 = vsel %vm125, %v122, 0
    %v169 = vsel %vm125, %v123, 0
    %v172 = vsel %vm125, %v124, 0
    %174 = vmatprep.subr.mxu0 0.0
    %175 = vmatpush1.xpose.msra.mxu0 %v151
    %176 = vmatprep.subr.mxu0 0.0
    %177 = vmatpush1.xpose.msra.mxu0 %v154
    %178 = vmatprep.subr.mxu0 0.0
    %179 = vmatpush1.xpose.msra.mxu0 %v157
    %180 = vmatprep.subr.mxu0 0.0
    %181 = vmatpush1.xpose.msra.mxu0 %v160
    %182 = vmatprep.subr.mxu0 0.0
    %183 = vmatpush1.xpose.msra.mxu0 %v163
    %184 = vmatprep.subr.mxu0 0.0
    %185 = vmatpush1.xpose.msra.mxu0 %v166
    %186 = vmatprep.subr.mxu0 0.0
    %187 = vmatpush1.xpose.msra.mxu0 %v169
    %188 = vmatprep.subr.mxu0 0.0
    %189 = vmatpush1.xpose.msra.mxu0 %v172
    %190 = vmatprep.subr.mxu0 0.0
    %191 = vmatpush1.xpose.msra.mxu0 0.0
    %192 = vmatprep.subr.mxu0 0.0
    %193 = vmatpush1.xpose.msra.mxu0 0.0
    %194 = vmatprep.subr.mxu0 0.0
    %195 = vmatpush1.xpose.msra.mxu0 0.0
    %196 = vmatprep.subr.mxu0 0.0
    %197 = vmatpush1.xpose.msra.mxu0 0.0
    %198 = vmatprep.subr.mxu0 0.0
    %199 = vmatpush1.xpose.msra.mxu0 0.0
    %200 = vmatprep.subr.mxu0 0.0
    %201 = vmatpush1.xpose.msra.mxu0 0.0
    %202 = vmatprep.subr.mxu0 0.0
    %203 = vmatpush1.xpose.msra.mxu0 0.0
    %204 = vmatprep.subr.mxu0 0.0
    %205 = vmatpush1.xpose.msra.mxu0 0.0
    %206 = vmatprep.subr.mxu0 0.0
    %207 = vmatpush1.xpose.msra.mxu0 0.0
    %208 = vmatprep.subr.mxu0 0.0
    %209 = vmatpush1.xpose.msra.mxu0 0.0
    %210 = vmatprep.subr.mxu0 0.0
    %211 = vmatpush1.xpose.msra.mxu0 0.0
    %212 = vmatprep.subr.mxu0 0.0
    %213 = vmatpush1.xpose.msra.mxu0 0.0
    %214 = vmatprep.subr.mxu0 0.0
    %215 = vmatpush1.xpose.msra.mxu0 0.0
    %216 = vmatprep.subr.mxu0 0.0
    %217 = vmatpush1.xpose.msra.mxu0 0.0
    %218 = vmatprep.subr.mxu0 0.0
    %219 = vmatpush1.xpose.msra.mxu0 0.0
    %220 = vmatprep.subr.mxu0 0.0
    %221 = vmatpush1.xpose.msra.mxu0 0.0
    %222 = vmatprep.subr.mxu0 0.0
    %223 = vmatpush1.xpose.msra.mxu0 0.0
    %224 = vmatprep.subr.mxu0 0.0
    %225 = vmatpush1.xpose.msra.mxu0 0.0
    %226 = vmatprep.subr.mxu0 0.0
    %227 = vmatpush1.xpose.msra.mxu0 0.0
    %228 = vmatprep.subr.mxu0 0.0
    %229 = vmatpush1.xpose.msra.mxu0 0.0
    %230 = vmatprep.subr.mxu0 0.0
    %231 = vmatpush1.xpose.msra.mxu0 0.0
    %232 = vmatprep.subr.mxu0 0.0
    %233 = vmatpush1.xpose.msra.mxu0 0.0
    %234 = vmatprep.subr.mxu0 0.0
    %235 = vmatpush1.xpose.msra.mxu0 0.0
    %236 = vmatprep.subr.mxu0 0.0
    %237 = vmatpush1.xpose.msra.mxu0 0.0
    %238 = vmatprep.mubr.f32.mxu0 0.0
    %239 = vmatmul.mubr.f32.gmra.mrb[0].mxu0 %v127
    %v240 = vpop.f32.mrb[0].mxu0
    %v241 = vadd.f32 0.0, %v240
    %v242 = vpop.f32.mrb[0].mxu0
    %243 = vmatprep.mubr.f32.mxu0 0.0
    %244 = vmatmul.mubr.f32.gmra.mrb[0].mxu0 %v130
    %v245 = vpop.f32.mrb[0].mxu0
    %v246 = vadd.f32 0.0, %v245
    %v247 = vpop.f32.mrb[0].mxu0
    %248 = vmatprep.mubr.f32.mxu0 0.0
    %249 = vmatmul.mubr.f32.gmra.mrb[0].mxu0 %v133
    %v250 = vpop.f32.mrb[0].mxu0
    %v251 = vadd.f32 0.0, %v250
    %v252 = vpop.f32.mrb[0].mxu0
    %253 = vmatprep.mubr.f32.mxu0 0.0
    %254 = vmatmul.mubr.f32.gmra.mrb[0].mxu0 %v136
    %v255 = vpop.f32.mrb[0].mxu0
    %v256 = vadd.f32 0.0, %v255
    %v257 = vpop.f32.mrb[0].mxu0
    %258 = vmatprep.mubr.f32.mxu0 0.0
    %259 = vmatmul.mubr.f32.gmra.mrb[0].mxu0 %v139
    %v260 = vpop.f32.mrb[0].mxu0
    %v261 = vadd.f32 0.0, %v260
    %v262 = vpop.f32.mrb[0].mxu0
    %263 = vmatprep.mubr.f32.mxu0 0.0
    %264 = vmatmul.mubr.f32.gmra.mrb[0].mxu0 %v142
    %v265 = vpop.f32.mrb[0].mxu0
    %v266 = vadd.f32 0.0, %v265
    %v267 = vpop.f32.mrb[0].mxu0
    %268 = vmatprep.mubr.f32.mxu0 0.0
    %269 = vmatmul.mubr.f32.gmra.mrb[0].mxu0 %v145
    %v270 = vpop.f32.mrb[0].mxu0
    %v271 = vadd.f32 0.0, %v270
    %v272 = vpop.f32.mrb[0].mxu0
    %273 = vmatprep.mubr.f32.mxu0 0.0
    %274 = vmatmul.mubr.f32.gmra.mrb[0].mxu0 %v148
    %v275 = vpop.f32.mrb[0].mxu0
    %v276 = vadd.f32 0.0, %v275
    %v277 = vpop.f32.mrb[0].mxu0
    %278 = vdwg.mxu0
    %v279 = vmul.f32 %v241, %v101
    %v280 = vmul.f32 %v246, %v102
    %v281 = vmul.f32 %v251, %v103
    %v282 = vmul.f32 %v256, %v104
    %v283 = vmul.f32 %v261, %v105
    %v284 = vmul.f32 %v266, %v106
    %v285 = vmul.f32 %v271, %v107
    %v286 = vmul.f32 %v276, %v108
    %vm287 = vcmask 523264
    %288 = vst.msk [vmem:[#allocation5] sm:$0xff] %vm287, %v279
    %289 = vst.msk [vmem:[#allocation5 + $0x8] sm:$0xff] %vm287, %v280
    %290 = vst.msk [vmem:[#allocation5 + $0x10] sm:$0xff] %vm287, %v281
    %291 = vst.msk [vmem:[#allocation5 + $0x18] sm:$0xff] %vm287, %v282
    %292 = vst.msk [vmem:[#allocation5 + $0x20] sm:$0xff] %vm287, %v283
    %293 = vst.msk [vmem:[#allocation5 + $0x28] sm:$0xff] %vm287, %v284
    %294 = vst.msk [vmem:[#allocation5 + $0x30] sm:$0xff] %vm287, %v285
    %295 = vst.msk [vmem:[#allocation5 + $0x38] sm:$0xff] %vm287, %v286
    // Predicated region
    $region22: #{gglr_forward.3} parent=1 // pred_check
      _
    $region23: #{gglr_forward.3} parent=1 // pred_check_branch
      %297 = sbr.rel (0) target = $region25
    $region24: #{gglr_forward.3} parent=1 // pred_region
      %s299 = ssub.s32 1024, 1024
      %300 = vsyncadd [#allocation3], %s299
      %s301 = sshll.u32 [#allocation5], 4
      %s302 = int_to_ptr.vmem [resolvable:$true] %s301
      %307 = dma.vmem_to_hbm [thread:$0]  %s302, 1024, %s4, [#allocation3], 128, 128, 8
    $region25: #{gglr_forward.3} parent=1 // pred_fallthru
      _
    // Predicated region
    $region26: #{gglr_forward.3} parent=1 // pred_check
      _
    $region27: #{gglr_forward.3} parent=1 // pred_check_branch
      %309 = sbr.rel (0) target = $region29
    $region28: #{gglr_forward.3} parent=1 // pred_region
      %310 = dma.done [#allocation3], 1024
    $region29: #{gglr_forward.3} parent=1 // pred_fallthru
      _
    %311 = vsyncpa [#allocation3], 1
    %312 = vsyncpa [#allocation4], 1

// kernel: gglr_forward.2
$region0: #{gglr_forward.2}
  #allocation0 [shape = 'u32[]', space=smem, size = 0x4, offset = 0x4, fixed_abs, tag = 'smem constant byte address 0x4 - core index']
  #allocation1 [shape = 'u32[144,128]{1,0:T(1,128)}', space=vmem, size = 0x12000, scoped, tag = 'internal scratch']
  %s0 = inlined_call_operand.vmem [shape: f32[64,32], index: 0, kind: input, shape index: {}]
  %s1 = inlined_call_operand.vmem [shape: f32[64,32], index: 1, kind: input, shape index: {}]
  %s2 = inlined_call_operand.vmem [shape: f32[64,64], index: 2, kind: input, shape index: {}]
  %s3 = inlined_call_operand.vmem [shape: f32[32,32], index: 3, kind: input, shape index: {}]
  %s4 = inlined_call_operand.vmem [shape: f32[1,32], index: 4, kind: input, shape index: {}]
  %s5 = inlined_call_operand.vmem [shape: f32[32,32], index: 5, kind: input, shape index: {}]
  %s6 = inlined_call_operand.vmem [shape: f32[1,32], index: 6, kind: input, shape index: {}]
  %s7 = inlined_call_operand.vmem [shape: f32[32,32], index: 7, kind: input, shape index: {}]
  %s8 = inlined_call_operand.vmem [shape: f32[1,32], index: 8, kind: input, shape index: {}]
  %s9 = inlined_call_operand.vmem [shape: f32[32,32], index: 9, kind: input, shape index: {}]
  %s10 = inlined_call_operand.vmem [shape: f32[1,32], index: 10, kind: input, shape index: {}]
  %s11 = inlined_call_operand.hbm [shape: f32[32,32], index: 11, kind: input, shape index: {}]
  %s12 = inlined_call_operand.vmem [shape: f32[64,128], index: 12, kind: output, shape index: {0}]
  %s13 = inlined_call_operand.vmem [shape: f32[64,32], index: 13, kind: output, shape index: {1}]
  %s14 = inlined_call_operand.vmem [shape: f32[64,32], index: 14, kind: output, shape index: {2}]
  %15 = xla_tuple %s12, %s13, %s14
  %s16 = sld [smem:[#allocation0]]
  $region78: #{gglr_forward.2} parent=0
    _
  %s18 = ssub.s32 1, %s16
  %s19 = scalar_select 0, %s18, %s16
  $region1: #{gglr_forward.2} parent=0
    #allocation2 [shape = 'u8[16384]{0}', space=vmem, size = 0x4000, scoped, tag = 'input window, operand 11, single buffered']
    #allocation3 [shape = 's32[1]{0}', space=sflag, size = 0x4, scoped, tag = 'scoped memory for gglr_forward.2']
    %20 = vsyncpa [#allocation3], 0
    // Predicated region
    $region2: #{gglr_forward.2} parent=1 // pred_check
      _
    $region3: #{gglr_forward.2} parent=1 // pred_check_branch
      %22 = sbr.rel (0) target = $region5
    $region4: #{gglr_forward.2} parent=1 // pred_region
      _
    $region5: #{gglr_forward.2} parent=1 // pred_fallthru
      _
    // Predicated region
    $region6: #{gglr_forward.2} parent=1 // pred_check
      _
    $region7: #{gglr_forward.2} parent=1 // pred_check_branch
      %24 = sbr.rel (0) target = $region9
    $region8: #{gglr_forward.2} parent=1 // pred_region
      _
    $region9: #{gglr_forward.2} parent=1 // pred_fallthru
      _
    // Predicated region
    $region10: #{gglr_forward.2} parent=1 // pred_check
      _
    $region11: #{gglr_forward.2} parent=1 // pred_check_branch
      %26 = sbr.rel (0) target = $region13
    $region12: #{gglr_forward.2} parent=1 // pred_region
      _
    $region13: #{gglr_forward.2} parent=1 // pred_fallthru
      _
    // Predicated region
    $region14: #{gglr_forward.2} parent=1 // pred_check
      _
    $region15: #{gglr_forward.2} parent=1 // pred_check_branch
      %28 = sbr.rel (0) target = $region17
    $region16: #{gglr_forward.2} parent=1 // pred_region
      _
    $region17: #{gglr_forward.2} parent=1 // pred_fallthru
      _
    // Predicated region
    $region18: #{gglr_forward.2} parent=1 // pred_check
      _
    $region19: #{gglr_forward.2} parent=1 // pred_check_branch
      %30 = sbr.rel (0) target = $region21
    $region20: #{gglr_forward.2} parent=1 // pred_region
      _
    $region21: #{gglr_forward.2} parent=1 // pred_fallthru
      _
    // Predicated region
    $region22: #{gglr_forward.2} parent=1 // pred_check
      _
    $region23: #{gglr_forward.2} parent=1 // pred_check_branch
      %32 = sbr.rel (0) target = $region25
    $region24: #{gglr_forward.2} parent=1 // pred_region
      _
    $region25: #{gglr_forward.2} parent=1 // pred_fallthru
      _
    // Predicated region
    $region26: #{gglr_forward.2} parent=1 // pred_check
      _
    $region27: #{gglr_forward.2} parent=1 // pred_check_branch
      %34 = sbr.rel (0) target = $region29
    $region28: #{gglr_forward.2} parent=1 // pred_region
      _
    $region29: #{gglr_forward.2} parent=1 // pred_fallthru
      _
    // Predicated region
    $region30: #{gglr_forward.2} parent=1 // pred_check
      _
    $region31: #{gglr_forward.2} parent=1 // pred_check_branch
      %36 = sbr.rel (0) target = $region33
    $region32: #{gglr_forward.2} parent=1 // pred_region
      _
    $region33: #{gglr_forward.2} parent=1 // pred_fallthru
      _
    // Predicated region
    $region34: #{gglr_forward.2} parent=1 // pred_check
      _
    $region35: #{gglr_forward.2} parent=1 // pred_check_branch
      %38 = sbr.rel (0) target = $region37
    $region36: #{gglr_forward.2} parent=1 // pred_region
      _
    $region37: #{gglr_forward.2} parent=1 // pred_fallthru
      _
    // Predicated region
    $region38: #{gglr_forward.2} parent=1 // pred_check
      _
    $region39: #{gglr_forward.2} parent=1 // pred_check_branch
      %40 = sbr.rel (0) target = $region41
    $region40: #{gglr_forward.2} parent=1 // pred_region
      _
    $region41: #{gglr_forward.2} parent=1 // pred_fallthru
      _
    // Predicated region
    $region42: #{gglr_forward.2} parent=1 // pred_check
      _
    $region43: #{gglr_forward.2} parent=1 // pred_check_branch
      %42 = sbr.rel (0) target = $region45
    $region44: #{gglr_forward.2} parent=1 // pred_region
      _
    $region45: #{gglr_forward.2} parent=1 // pred_fallthru
      _
    // Predicated region
    $region46: #{gglr_forward.2} parent=1 // pred_check
      _
    $region47: #{gglr_forward.2} parent=1 // pred_check_branch
      %44 = sbr.rel (0) target = $region49
    $region48: #{gglr_forward.2} parent=1 // pred_region
      %s46 = ssub.s32 512, 512
      %47 = vsyncadd [#allocation3], %s46
      %s48 = sshll.u32 [#allocation2], 4
      %s49 = int_to_ptr.vmem [resolvable:$true] %s48
      %54 = dma.hbm_to_vmem [thread:$0]  %s11, 512, %s49, [#allocation3], 128, 128, 8
    $region49: #{gglr_forward.2} parent=1 // pred_fallthru
      _
    // Predicated region
    $region50: #{gglr_forward.2} parent=1 // pred_check
      _
    $region51: #{gglr_forward.2} parent=1 // pred_check_branch
      %56 = sbr.rel (0) target = $region53
    $region52: #{gglr_forward.2} parent=1 // pred_region
      %57 = dma.done [#allocation3], 512
    $region53: #{gglr_forward.2} parent=1 // pred_fallthru
      _
    %v58 = vld [vmem:[%s2] sm:$0xff]
    %v59 = vld [vmem:[%s2 + $0x8] sm:$0xff]
    %v60 = vld [vmem:[%s2 + $0x10] sm:$0xff]
    %v61 = vld [vmem:[%s2 + $0x18] sm:$0xff]
    %v62 = vld [vmem:[%s2 + $0x20] sm:$0xff]
    %v63 = vld [vmem:[%s2 + $0x28] sm:$0xff]
    %v64 = vld [vmem:[%s2 + $0x30] sm:$0xff]
    %v65 = vld [vmem:[%s2 + $0x38] sm:$0xff]
    %vm66 = vcmp.gt.f32.partialorder %v58, 0.0
    %vm67 = vcmp.gt.f32.partialorder %v59, 0.0
    %vm68 = vcmp.gt.f32.partialorder %v60, 0.0
    %vm69 = vcmp.gt.f32.partialorder %v61, 0.0
    %vm70 = vcmp.gt.f32.partialorder %v62, 0.0
    %vm71 = vcmp.gt.f32.partialorder %v63, 0.0
    %vm72 = vcmp.gt.f32.partialorder %v64, 0.0
    %vm73 = vcmp.gt.f32.partialorder %v65, 0.0
    %v74 = vsel %vm66, 1.0, 0.0
    %v75 = vsel %vm67, 1.0, 0.0
    %v76 = vsel %vm68, 1.0, 0.0
    %v77 = vsel %vm69, 1.0, 0.0
    %v78 = vsel %vm70, 1.0, 0.0
    %v79 = vsel %vm71, 1.0, 0.0
    %v80 = vsel %vm72, 1.0, 0.0
    %v81 = vsel %vm73, 1.0, 0.0
    %vm82 = vcmask 523264
    %v83 = vsel %vm82, %v74, 0.0
    %84 = vadd.xlane.f32.xlu0 %v83
    %v85 = vpop.xlane.xlu0 %84
    %v86 = vsel %vm82, %v75, 0.0
    %87 = vadd.xlane.f32.xlu0 %v86
    %v88 = vpop.xlane.xlu0 %87
    %v89 = vsel %vm82, %v76, 0.0
    %90 = vadd.xlane.f32.xlu0 %v89
    %v91 = vpop.xlane.xlu0 %90
    %v92 = vsel %vm82, %v77, 0.0
    %93 = vadd.xlane.f32.xlu0 %v92
    %v94 = vpop.xlane.xlu0 %93
    %v95 = vsel %vm82, %v78, 0.0
    %96 = vadd.xlane.f32.xlu0 %v95
    %v97 = vpop.xlane.xlu0 %96
    %v98 = vsel %vm82, %v79, 0.0
    %99 = vadd.xlane.f32.xlu0 %v98
    %v100 = vpop.xlane.xlu0 %99
    %v101 = vsel %vm82, %v80, 0.0
    %102 = vadd.xlane.f32.xlu0 %v101
    %v103 = vpop.xlane.xlu0 %102
    %v104 = vsel %vm82, %v81, 0.0
    %105 = vadd.xlane.f32.xlu0 %v104
    %v106 = vpop.xlane.xlu0 %105
    %107 = vxpose.xlu0.b32.start [1/16] %v74, 128
    %108 = vxpose.xlu0.b32.cont [2/16] %v75, 128
    %109 = vxpose.xlu0.b32.cont [3/16] %v76, 128
    %110 = vxpose.xlu0.b32.cont [4/16] %v77, 128
    %111 = vxpose.xlu0.b32.cont [5/16] %v78, 128
    %112 = vxpose.xlu0.b32.cont [6/16] %v79, 128
    %113 = vxpose.xlu0.b32.cont [7/16] %v80, 128
    %114 = vxpose.xlu0.b32.cont [8/16] %v81, 128
    %115 = vxpose.xlu0.b32.cont [9/16] 0.0, 128
    %116 = vxpose.xlu0.b32.cont [10/16] 0.0, 128
    %117 = vxpose.xlu0.b32.cont [11/16] 0.0, 128
    %118 = vxpose.xlu0.b32.cont [12/16] 0.0, 128
    %119 = vxpose.xlu0.b32.cont [13/16] 0.0, 128
    %120 = vxpose.xlu0.b32.cont [14/16] 0.0, 128
    %121 = vxpose.xlu0.b32.cont [15/16] 0.0, 128
    %122 = vxpose.xlu0.b32.end [16/16] 0.0, 128
    %v123 = vpop.trf.xlu0
    %v124 = vpop.trf.xlu0
    %v125 = vpop.trf.xlu0
    %v126 = vpop.trf.xlu0
    %v127 = vpop.trf.xlu0
    %v128 = vpop.trf.xlu0
    %v129 = vpop.trf.xlu0
    %v130 = vpop.trf.xlu0
    %v131 = vpop.trf.xlu0
    %v132 = vpop.trf.xlu0
    %v133 = vpop.trf.xlu0
    %v134 = vpop.trf.xlu0
    %v135 = vpop.trf.xlu0
    %v136 = vpop.trf.xlu0
    %v137 = vpop.trf.xlu0
    %v138 = vpop.trf.xlu0
    %v140 = vsel %vm82, %v123, 0
    %v143 = vsel %vm82, %v124, 0
    %v146 = vsel %vm82, %v125, 0
    %v149 = vsel %vm82, %v126, 0
    %v152 = vsel %vm82, %v127, 0
    %v155 = vsel %vm82, %v128, 0
    %v158 = vsel %vm82, %v129, 0
    %v161 = vsel %vm82, %v130, 0
    %163 = vmatprep.subr.mxu0 0.0
    %164 = vmatpush1.msra.mxu0 1.0
    %165 = vmatprep.subr.mxu0 0.0
    %166 = vmatpush1.msra.mxu0 1.0
    %167 = vmatprep.subr.mxu0 0.0
    %168 = vmatpush1.msra.mxu0 1.0
    %169 = vmatprep.subr.mxu0 0.0
    %170 = vmatpush1.msra.mxu0 1.0
    %171 = vmatprep.subr.mxu0 0.0
    %172 = vmatpush1.msra.mxu0 1.0
    %173 = vmatprep.subr.mxu0 0.0
    %174 = vmatpush1.msra.mxu0 1.0
    %175 = vmatprep.subr.mxu0 0.0
    %176 = vmatpush1.msra.mxu0 1.0
    %177 = vmatprep.subr.mxu0 0.0
    %178 = vmatpush1.msra.mxu0 1.0
    %179 = vmatprep.subr.mxu0 0.0
    %180 = vmatpush1.msra.mxu0 0.0
    %181 = vmatprep.subr.mxu0 0.0
    %182 = vmatpush1.msra.mxu0 0.0
    %183 = vmatprep.subr.mxu0 0.0
    %184 = vmatpush1.msra.mxu0 0.0
    %185 = vmatprep.subr.mxu0 0.0
    %186 = vmatpush1.msra.mxu0 0.0
    %187 = vmatprep.subr.mxu0 0.0
    %188 = vmatpush1.msra.mxu0 0.0
    %189 = vmatprep.subr.mxu0 0.0
    %190 = vmatpush1.msra.mxu0 0.0
    %191 = vmatprep.subr.mxu0 0.0
    %192 = vmatpush1.msra.mxu0 0.0
    %193 = vmatprep.subr.mxu0 0.0
    %194 = vmatpush1.msra.mxu0 0.0
    %195 = vmatprep.subr.mxu0 0.0
    %196 = vmatpush1.msra.mxu0 0.0
    %197 = vmatprep.subr.mxu0 0.0
    %198 = vmatpush1.msra.mxu0 0.0
    %199 = vmatprep.subr.mxu0 0.0
    %200 = vmatpush1.msra.mxu0 0.0
    %201 = vmatprep.subr.mxu0 0.0
    %202 = vmatpush1.msra.mxu0 0.0
    %203 = vmatprep.subr.mxu0 0.0
    %204 = vmatpush1.msra.mxu0 0.0
    %205 = vmatprep.subr.mxu0 0.0
    %206 = vmatpush1.msra.mxu0 0.0
    %207 = vmatprep.subr.mxu0 0.0
    %208 = vmatpush1.msra.mxu0 0.0
    %209 = vmatprep.subr.mxu0 0.0
    %210 = vmatpush1.msra.mxu0 0.0
    %211 = vmatprep.subr.mxu0 0.0
    %212 = vmatpush1.msra.mxu0 0.0
    %213 = vmatprep.subr.mxu0 0.0
    %214 = vmatpush1.msra.mxu0 0.0
    %215 = vmatprep.subr.mxu0 0.0
    %216 = vmatpush1.msra.mxu0 0.0
    %217 = vmatprep.subr.mxu0 0.0
    %218 = vmatpush1.msra.mxu0 0.0
    %219 = vmatprep.subr.mxu0 0.0
    %220 = vmatpush1.msra.mxu0 0.0
    %221 = vmatprep.subr.mxu0 0.0
    %222 = vmatpush1.msra.mxu0 0.0
    %223 = vmatprep.subr.mxu0 0.0
    %224 = vmatpush1.msra.mxu0 0.0
    %225 = vmatprep.subr.mxu0 0.0
    %226 = vmatpush1.msra.mxu0 0.0
    %227 = vmatprep.mubr.f32.mxu0 0.0
    %228 = vmatmul.mubr.f32.gmra.mrb[0].mxu0 %v140
    %v229 = vpop.f32.mrb[0].mxu0
    %v230 = vadd.f32 0.0, %v229
    %v231 = vpop.f32.mrb[0].mxu0
    %232 = vmatprep.mubr.f32.mxu0 0.0
    %233 = vmatmul.mubr.f32.gmra.mrb[0].mxu0 %v143
    %v234 = vpop.f32.mrb[0].mxu0
    %v235 = vadd.f32 0.0, %v234
    %v236 = vpop.f32.mrb[0].mxu0
    %237 = vmatprep.mubr.f32.mxu0 0.0
    %238 = vmatmul.mubr.f32.gmra.mrb[0].mxu0 %v146
    %v239 = vpop.f32.mrb[0].mxu0
    %v240 = vadd.f32 0.0, %v239
    %v241 = vpop.f32.mrb[0].mxu0
    %242 = vmatprep.mubr.f32.mxu0 0.0
    %243 = vmatmul.mubr.f32.gmra.mrb[0].mxu0 %v149
    %v244 = vpop.f32.mrb[0].mxu0
    %v245 = vadd.f32 0.0, %v244
    %v246 = vpop.f32.mrb[0].mxu0
    %247 = vmatprep.mubr.f32.mxu0 0.0
    %248 = vmatmul.mubr.f32.gmra.mrb[0].mxu0 %v152
    %v249 = vpop.f32.mrb[0].mxu0
    %v250 = vadd.f32 0.0, %v249
    %v251 = vpop.f32.mrb[0].mxu0
    %252 = vmatprep.mubr.f32.mxu0 0.0
    %253 = vmatmul.mubr.f32.gmra.mrb[0].mxu0 %v155
    %v254 = vpop.f32.mrb[0].mxu0
    %v255 = vadd.f32 0.0, %v254
    %v256 = vpop.f32.mrb[0].mxu0
    %257 = vmatprep.mubr.f32.mxu0 0.0
    %258 = vmatmul.mubr.f32.gmra.mrb[0].mxu0 %v158
    %v259 = vpop.f32.mrb[0].mxu0
    %v260 = vadd.f32 0.0, %v259
    %v261 = vpop.f32.mrb[0].mxu0
    %262 = vmatprep.mubr.f32.mxu0 0.0
    %263 = vmatmul.mubr.f32.gmra.mrb[0].mxu0 %v161
    %v264 = vpop.f32.mrb[0].mxu0
    %v265 = vadd.f32 0.0, %v264
    %v266 = vpop.f32.mrb[0].mxu0
    %267 = vdwg.mxu0
    %v268 = vadd.f32 %v230, 1.0
    %v269 = vadd.f32 %v235, 1.0
    %v270 = vadd.f32 %v240, 1.0
    %v271 = vadd.f32 %v245, 1.0
    %v272 = vadd.f32 %v250, 1.0
    %v273 = vadd.f32 %v255, 1.0
    %v274 = vadd.f32 %v260, 1.0
    %v275 = vadd.f32 %v265, 1.0
    %v276 = vrsqrt.pop %v268
    %v277 = vrsqrt.pop %v269
    %v278 = vrsqrt.pop %v270
    %v279 = vrsqrt.pop %v271
    %v280 = vrsqrt.pop %v272
    %v281 = vrsqrt.pop %v273
    %v282 = vrsqrt.pop %v274
    %v283 = vrsqrt.pop %v275
    %v284 = vadd.f32 %v85, 1.0
    %v285 = vadd.f32 %v88, 1.0
    %v286 = vadd.f32 %v91, 1.0
    %v287 = vadd.f32 %v94, 1.0
    %v288 = vadd.f32 %v97, 1.0
    %v289 = vadd.f32 %v100, 1.0
    %v290 = vadd.f32 %v103, 1.0
    %v291 = vadd.f32 %v106, 1.0
    %v292 = vrsqrt.pop %v284
    %v293 = vrsqrt.pop %v285
    %v294 = vrsqrt.pop %v286
    %v295 = vrsqrt.pop %v287
    %v296 = vrsqrt.pop %v288
    %v297 = vrsqrt.pop %v289
    %v298 = vrsqrt.pop %v290
    %v299 = vrsqrt.pop %v291
    %v300 = vadd.f32 %v85, 1e-07
    %v301 = vadd.f32 %v88, 1e-07
    %v302 = vadd.f32 %v91, 1e-07
    %v303 = vadd.f32 %v94, 1e-07
    %v304 = vadd.f32 %v97, 1e-07
    %v305 = vadd.f32 %v100, 1e-07
    %v306 = vadd.f32 %v103, 1e-07
    %v307 = vadd.f32 %v106, 1e-07
    %v308 = vrcp.pop %v300
    %v309 = vmul.f32 1.0, %v308
    %v310 = vrcp.pop %v301
    %v311 = vmul.f32 1.0, %v310
    %v312 = vrcp.pop %v302
    %v313 = vmul.f32 1.0, %v312
    %v314 = vrcp.pop %v303
    %v315 = vmul.f32 1.0, %v314
    %v316 = vrcp.pop %v304
    %v317 = vmul.f32 1.0, %v316
    %v318 = vrcp.pop %v305
    %v319 = vmul.f32 1.0, %v318
    %v320 = vrcp.pop %v306
    %v321 = vmul.f32 1.0, %v320
    %v322 = vrcp.pop %v307
    %v323 = vmul.f32 1.0, %v322
    %v324 = vadd.f32 %v230, 1e-07
    %v325 = vadd.f32 %v235, 1e-07
    %v326 = vadd.f32 %v240, 1e-07
    %v327 = vadd.f32 %v245, 1e-07
    %v328 = vadd.f32 %v250, 1e-07
    %v329 = vadd.f32 %v255, 1e-07
    %v330 = vadd.f32 %v260, 1e-07
    %v331 = vadd.f32 %v265, 1e-07
    %v332 = vrcp.pop %v324
    %v333 = vmul.f32 1.0, %v332
    %v334 = vrcp.pop %v325
    %v335 = vmul.f32 1.0, %v334
    %v336 = vrcp.pop %v326
    %v337 = vmul.f32 1.0, %v336
    %v338 = vrcp.pop %v327
    %v339 = vmul.f32 1.0, %v338
    %v340 = vrcp.pop %v328
    %v341 = vmul.f32 1.0, %v340
    %v342 = vrcp.pop %v329
    %v343 = vmul.f32 1.0, %v342
    %v344 = vrcp.pop %v330
    %v345 = vmul.f32 1.0, %v344
    %v346 = vrcp.pop %v331
    %v347 = vmul.f32 1.0, %v346
    %v348 = vld [vmem:[%s0] sm:$0xff]
    %v349 = vld [vmem:[%s0 + $0x8] sm:$0xff]
    %v350 = vld [vmem:[%s0 + $0x10] sm:$0xff]
    %v351 = vld [vmem:[%s0 + $0x18] sm:$0xff]
    %v352 = vld [vmem:[%s0 + $0x20] sm:$0xff]
    %v353 = vld [vmem:[%s0 + $0x28] sm:$0xff]
    %v354 = vld [vmem:[%s0 + $0x30] sm:$0xff]
    %v355 = vld [vmem:[%s0 + $0x38] sm:$0xff]
    %v356 = vld [vmem:[%s3] sm:$0xff]
    %v357 = vld [vmem:[%s3 + $0x8] sm:$0xff]
    %v358 = vld [vmem:[%s3 + $0x10] sm:$0xff]
    %v359 = vld [vmem:[%s3 + $0x18] sm:$0xff]
    %v360 = vld [vmem:[%s4] sm:$0x1]
    %v362 = vlaneseq
    %v363 = vshrl.u32 %v362, 7
    %v364 = vsub.s32 0, %v363
    %v365 = vrot.slane %v360, %v364
    %vm367 = vcmask 261120
    %v369 = vsel %vm367, %v348, 0
    %v372 = vsel %vm367, %v349, 0
    %v375 = vsel %vm367, %v350, 0
    %v378 = vsel %vm367, %v351, 0
    %v381 = vsel %vm367, %v352, 0
    %v384 = vsel %vm367, %v353, 0
    %v387 = vsel %vm367, %v354, 0
    %v390 = vsel %vm367, %v355, 0
    %392 = vmatprep.subr.mxu0 0.0
    %393 = vmatpush1.msra.mxu0 %v356
    %394 = vmatprep.subr.mxu0 0.0
    %395 = vmatpush1.msra.mxu0 %v357
    %396 = vmatprep.subr.mxu0 0.0
    %397 = vmatpush1.msra.mxu0 %v358
    %398 = vmatprep.subr.mxu0 0.0
    %399 = vmatpush1.msra.mxu0 %v359
    %400 = vmatprep.subr.mxu0 0.0
    %401 = vmatpush1.msra.mxu0 0.0
    %402 = vmatprep.subr.mxu0 0.0
    %403 = vmatpush1.msra.mxu0 0.0
    %404 = vmatprep.subr.mxu0 0.0
    %405 = vmatpush1.msra.mxu0 0.0
    %406 = vmatprep.subr.mxu0 0.0
    %407 = vmatpush1.msra.mxu0 0.0
    %408 = vmatprep.subr.mxu0 0.0
    %409 = vmatpush1.msra.mxu0 0.0
    %410 = vmatprep.subr.mxu0 0.0
    %411 = vmatpush1.msra.mxu0 0.0
    %412 = vmatprep.subr.mxu0 0.0
    %413 = vmatpush1.msra.mxu0 0.0
    %414 = vmatprep.subr.mxu0 0.0
    %415 = vmatpush1.msra.mxu0 0.0
    %416 = vmatprep.subr.mxu0 0.0
    %417 = vmatpush1.msra.mxu0 0.0
    %418 = vmatprep.subr.mxu0 0.0
    %419 = vmatpush1.msra.mxu0 0.0
    %420 = vmatprep.subr.mxu0 0.0
    %421 = vmatpush1.msra.mxu0 0.0
    %422 = vmatprep.subr.mxu0 0.0
    %423 = vmatpush1.msra.mxu0 0.0
    %424 = vmatprep.subr.mxu0 0.0
    %425 = vmatpush1.msra.mxu0 0.0
    %426 = vmatprep.subr.mxu0 0.0
    %427 = vmatpush1.msra.mxu0 0.0
    %428 = vmatprep.subr.mxu0 0.0
    %429 = vmatpush1.msra.mxu0 0.0
    %430 = vmatprep.subr.mxu0 0.0
    %431 = vmatpush1.msra.mxu0 0.0
    %432 = vmatprep.subr.mxu0 0.0
    %433 = vmatpush1.msra.mxu0 0.0
    %434 = vmatprep.subr.mxu0 0.0
    %435 = vmatpush1.msra.mxu0 0.0
    %436 = vmatprep.subr.mxu0 0.0
    %437 = vmatpush1.msra.mxu0 0.0
    %438 = vmatprep.subr.mxu0 0.0
    %439 = vmatpush1.msra.mxu0 0.0
    %440 = vmatprep.subr.mxu0 0.0
    %441 = vmatpush1.msra.mxu0 0.0
    %442 = vmatprep.subr.mxu0 0.0
    %443 = vmatpush1.msra.mxu0 0.0
    %444 = vmatprep.subr.mxu0 0.0
    %445 = vmatpush1.msra.mxu0 0.0
    %446 = vmatprep.subr.mxu0 0.0
    %447 = vmatpush1.msra.mxu0 0.0
    %448 = vmatprep.subr.mxu0 0.0
    %449 = vmatpush1.msra.mxu0 0.0
    %450 = vmatprep.subr.mxu0 0.0
    %451 = vmatpush1.msra.mxu0 0.0
    %452 = vmatprep.subr.mxu0 0.0
    %453 = vmatpush1.msra.mxu0 0.0
    %454 = vmatprep.subr.mxu0 0.0
    %455 = vmatpush1.msra.mxu0 0.0
    %456 = vmatprep.mubr.f32.mxu0 0.0
    %457 = vmatmul.mubr.f32.gmra.mrb[0].mxu0 %v369
    %v458 = vpop.f32.mrb[0].mxu0
    %v459 = vadd.f32 %v365, %v458
    %v460 = vpop.f32.mrb[0].mxu0
    %461 = vmatprep.mubr.f32.mxu0 0.0
    %462 = vmatmul.mubr.f32.gmra.mrb[0].mxu0 %v372
    %v463 = vpop.f32.mrb[0].mxu0
    %v464 = vadd.f32 %v365, %v463
    %v465 = vpop.f32.mrb[0].mxu0
    %466 = vmatprep.mubr.f32.mxu0 0.0
    %467 = vmatmul.mubr.f32.gmra.mrb[0].mxu0 %v375
    %v468 = vpop.f32.mrb[0].mxu0
    %v469 = vadd.f32 %v365, %v468
    %v470 = vpop.f32.mrb[0].mxu0
    %471 = vmatprep.mubr.f32.mxu0 0.0
    %472 = vmatmul.mubr.f32.gmra.mrb[0].mxu0 %v378
    %v473 = vpop.f32.mrb[0].mxu0
    %v474 = vadd.f32 %v365, %v473
    %v475 = vpop.f32.mrb[0].mxu0
    %476 = vmatprep.mubr.f32.mxu0 0.0
    %477 = vmatmul.mubr.f32.gmra.mrb[0].mxu0 %v381
    %v478 = vpop.f32.mrb[0].mxu0
    %v479 = vadd.f32 %v365, %v478
    %v480 = vpop.f32.mrb[0].mxu0
    %481 = vmatprep.mubr.f32.mxu0 0.0
    %482 = vmatmul.mubr.f32.gmra.mrb[0].mxu0 %v384
    %v483 = vpop.f32.mrb[0].mxu0
    %v484 = vadd.f32 %v365, %v483
    %v485 = vpop.f32.mrb[0].mxu0
    %486 = vmatprep.mubr.f32.mxu0 0.0
    %487 = vmatmul.mubr.f32.gmra.mrb[0].mxu0 %v387
    %v488 = vpop.f32.mrb[0].mxu0
    %v489 = vadd.f32 %v365, %v488
    %v490 = vpop.f32.mrb[0].mxu0
    %491 = vmatprep.mubr.f32.mxu0 0.0
    %492 = vmatmul.mubr.f32.gmra.mrb[0].mxu0 %v390
    %v493 = vpop.f32.mrb[0].mxu0
    %v494 = vadd.f32 %v365, %v493
    %v495 = vpop.f32.mrb[0].mxu0
    %496 = vdwg.mxu0
    %498 = vset.pattern.permute.xlu0 0
    %499 = vperm.xlu0 %498, %v276
    %v500 = vpop.permute.xlu0 %499
    %503 = vset.pattern.permute.xlu0 0
    %504 = vperm.xlu0 %503, %v277
    %v505 = vpop.permute.xlu0 %504
    %508 = vset.pattern.permute.xlu0 0
    %509 = vperm.xlu0 %508, %v278
    %v510 = vpop.permute.xlu0 %509
    %513 = vset.pattern.permute.xlu0 0
    %514 = vperm.xlu0 %513, %v279
    %v515 = vpop.permute.xlu0 %514
    %518 = vset.pattern.permute.xlu0 0
    %519 = vperm.xlu0 %518, %v280
    %v520 = vpop.permute.xlu0 %519
    %523 = vset.pattern.permute.xlu0 0
    %524 = vperm.xlu0 %523, %v281
    %v525 = vpop.permute.xlu0 %524
    %528 = vset.pattern.permute.xlu0 0
    %529 = vperm.xlu0 %528, %v282
    %v530 = vpop.permute.xlu0 %529
    %533 = vset.pattern.permute.xlu0 0
    %534 = vperm.xlu0 %533, %v283
    %v535 = vpop.permute.xlu0 %534
    %v537 = vmul.f32 %v500, %v459
    %v538 = vmul.f32 %v505, %v464
    %v539 = vmul.f32 %v510, %v469
    %v540 = vmul.f32 %v515, %v474
    %v541 = vmul.f32 %v520, %v479
    %v542 = vmul.f32 %v525, %v484
    %v543 = vmul.f32 %v530, %v489
    %v544 = vmul.f32 %v535, %v494
    %545 = vmatprep.subr.mxu0 0.0
    %546 = vmatpush1.msra.mxu0 %v537
    %547 = vmatprep.subr.mxu0 0.0
    %548 = vmatpush1.msra.mxu0 %v538
    %549 = vmatprep.subr.mxu0 0.0
    %550 = vmatpush1.msra.mxu0 %v539
    %551 = vmatprep.subr.mxu0 0.0
    %552 = vmatpush1.msra.mxu0 %v540
    %553 = vmatprep.subr.mxu0 0.0
    %554 = vmatpush1.msra.mxu0 %v541
    %555 = vmatprep.subr.mxu0 0.0
    %556 = vmatpush1.msra.mxu0 %v542
    %557 = vmatprep.subr.mxu0 0.0
    %558 = vmatpush1.msra.mxu0 %v543
    %559 = vmatprep.subr.mxu0 0.0
    %560 = vmatpush1.msra.mxu0 %v544
    %561 = vmatprep.subr.mxu0 0.0
    %562 = vmatpush1.msra.mxu0 0.0
    %563 = vmatprep.subr.mxu0 0.0
    %564 = vmatpush1.msra.mxu0 0.0
    %565 = vmatprep.subr.mxu0 0.0
    %566 = vmatpush1.msra.mxu0 0.0
    %567 = vmatprep.subr.mxu0 0.0
    %568 = vmatpush1.msra.mxu0 0.0
    %569 = vmatprep.subr.mxu0 0.0
    %570 = vmatpush1.msra.mxu0 0.0
    %571 = vmatprep.subr.mxu0 0.0
    %572 = vmatpush1.msra.mxu0 0.0
    %573 = vmatprep.subr.mxu0 0.0
    %574 = vmatpush1.msra.mxu0 0.0
    %575 = vmatprep.subr.mxu0 0.0
    %576 = vmatpush1.msra.mxu0 0.0
    %577 = vmatprep.subr.mxu0 0.0
    %578 = vmatpush1.msra.mxu0 0.0
    %579 = vmatprep.subr.mxu0 0.0
    %580 = vmatpush1.msra.mxu0 0.0
    %581 = vmatprep.subr.mxu0 0.0
    %582 = vmatpush1.msra.mxu0 0.0
    %583 = vmatprep.subr.mxu0 0.0
    %584 = vmatpush1.msra.mxu0 0.0
    %585 = vmatprep.subr.mxu0 0.0
    %586 = vmatpush1.msra.mxu0 0.0
    %587 = vmatprep.subr.mxu0 0.0
    %588 = vmatpush1.msra.mxu0 0.0
    %589 = vmatprep.subr.mxu0 0.0
    %590 = vmatpush1.msra.mxu0 0.0
    %591 = vmatprep.subr.mxu0 0.0
    %592 = vmatpush1.msra.mxu0 0.0
    %593 = vmatprep.subr.mxu0 0.0
    %594 = vmatpush1.msra.mxu0 0.0
    %595 = vmatprep.subr.mxu0 0.0
    %596 = vmatpush1.msra.mxu0 0.0
    %597 = vmatprep.subr.mxu0 0.0
    %598 = vmatpush1.msra.mxu0 0.0
    %599 = vmatprep.subr.mxu0 0.0
    %600 = vmatpush1.msra.mxu0 0.0
    %601 = vmatprep.subr.mxu0 0.0
    %602 = vmatpush1.msra.mxu0 0.0
    %603 = vmatprep.subr.mxu0 0.0
    %604 = vmatpush1.msra.mxu0 0.0
    %605 = vmatprep.subr.mxu0 0.0
    %606 = vmatpush1.msra.mxu0 0.0
    %607 = vmatprep.subr.mxu0 0.0
    %608 = vmatpush1.msra.mxu0 0.0
    %609 = vmatprep.mubr.f32.mxu0 0.0
    %610 = vmatmul.mubr.f32.gmra.mrb[0].mxu0 %v140
    %v611 = vpop.f32.mrb[0].mxu0
    %v612 = vadd.f32 %v537, %v611
    %v613 = vpop.f32.mrb[0].mxu0
    %614 = vmatprep.mubr.f32.mxu0 0.0
    %615 = vmatmul.mubr.f32.gmra.mrb[0].mxu0 %v143
    %v616 = vpop.f32.mrb[0].mxu0
    %v617 = vadd.f32 %v538, %v616
    %v618 = vpop.f32.mrb[0].mxu0
    %619 = vmatprep.mubr.f32.mxu0 0.0
    %620 = vmatmul.mubr.f32.gmra.mrb[0].mxu0 %v146
    %v621 = vpop.f32.mrb[0].mxu0
    %v622 = vadd.f32 %v539, %v621
    %v623 = vpop.f32.mrb[0].mxu0
    %624 = vmatprep.mubr.f32.mxu0 0.0
    %625 = vmatmul.mubr.f32.gmra.mrb[0].mxu0 %v149
    %v626 = vpop.f32.mrb[0].mxu0
    %v627 = vadd.f32 %v540, %v626
    %v628 = vpop.f32.mrb[0].mxu0
    %629 = vmatprep.mubr.f32.mxu0 0.0
    %630 = vmatmul.mubr.f32.gmra.mrb[0].mxu0 %v152
    %v631 = vpop.f32.mrb[0].mxu0
    %v632 = vadd.f32 %v541, %v631
    %v633 = vpop.f32.mrb[0].mxu0
    %634 = vmatprep.mubr.f32.mxu0 0.0
    %635 = vmatmul.mubr.f32.gmra.mrb[0].mxu0 %v155
    %v636 = vpop.f32.mrb[0].mxu0
    %v637 = vadd.f32 %v542, %v636
    %v638 = vpop.f32.mrb[0].mxu0
    %639 = vmatprep.mubr.f32.mxu0 0.0
    %640 = vmatmul.mubr.f32.gmra.mrb[0].mxu0 %v158
    %v641 = vpop.f32.mrb[0].mxu0
    %v642 = vadd.f32 %v543, %v641
    %v643 = vpop.f32.mrb[0].mxu0
    %644 = vmatprep.mubr.f32.mxu0 0.0
    %645 = vmatmul.mubr.f32.gmra.mrb[0].mxu0 %v161
    %v646 = vpop.f32.mrb[0].mxu0
    %v647 = vadd.f32 %v544, %v646
    %v648 = vpop.f32.mrb[0].mxu0
    %649 = vdwg.mxu0
    %v650 = vmul.f32 %v500, %v612
    %v651 = vmul.f32 %v505, %v617
    %v652 = vmul.f32 %v510, %v622
    %v653 = vmul.f32 %v515, %v627
    %v654 = vmul.f32 %v520, %v632
    %v655 = vmul.f32 %v525, %v637
    %v656 = vmul.f32 %v530, %v642
    %v657 = vmul.f32 %v535, %v647
    %v659 = vsel %vm82, %v58, 0
    %v662 = vsel %vm82, %v59, 0
    %v665 = vsel %vm82, %v60, 0
    %v668 = vsel %vm82, %v61, 0
    %v671 = vsel %vm82, %v62, 0
    %v674 = vsel %vm82, %v63, 0
    %v677 = vsel %vm82, %v64, 0
    %v680 = vsel %vm82, %v65, 0
    %682 = vmatprep.subr.mxu0 0.0
    %683 = vmatpush1.msra.mxu0 %v650
    %684 = vmatprep.subr.mxu0 0.0
    %685 = vmatpush1.msra.mxu0 %v651
    %686 = vmatprep.subr.mxu0 0.0
    %687 = vmatpush1.msra.mxu0 %v652
    %688 = vmatprep.subr.mxu0 0.0
    %689 = vmatpush1.msra.mxu0 %v653
    %690 = vmatprep.subr.mxu0 0.0
    %691 = vmatpush1.msra.mxu0 %v654
    %692 = vmatprep.subr.mxu0 0.0
    %693 = vmatpush1.msra.mxu0 %v655
    %694 = vmatprep.subr.mxu0 0.0
    %695 = vmatpush1.msra.mxu0 %v656
    %696 = vmatprep.subr.mxu0 0.0
    %697 = vmatpush1.msra.mxu0 %v657
    %698 = vmatprep.subr.mxu0 0.0
    %699 = vmatpush1.msra.mxu0 0.0
    %700 = vmatprep.subr.mxu0 0.0
    %701 = vmatpush1.msra.mxu0 0.0
    %702 = vmatprep.subr.mxu0 0.0
    %703 = vmatpush1.msra.mxu0 0.0
    %704 = vmatprep.subr.mxu0 0.0
    %705 = vmatpush1.msra.mxu0 0.0
    %706 = vmatprep.subr.mxu0 0.0
    %707 = vmatpush1.msra.mxu0 0.0
    %708 = vmatprep.subr.mxu0 0.0
    %709 = vmatpush1.msra.mxu0 0.0
    %710 = vmatprep.subr.mxu0 0.0
    %711 = vmatpush1.msra.mxu0 0.0
    %712 = vmatprep.subr.mxu0 0.0
    %713 = vmatpush1.msra.mxu0 0.0
    %714 = vmatprep.subr.mxu0 0.0
    %715 = vmatpush1.msra.mxu0 0.0
    %716 = vmatprep.subr.mxu0 0.0
    %717 = vmatpush1.msra.mxu0 0.0
    %718 = vmatprep.subr.mxu0 0.0
    %719 = vmatpush1.msra.mxu0 0.0
    %720 = vmatprep.subr.mxu0 0.0
    %721 = vmatpush1.msra.mxu0 0.0
    %722 = vmatprep.subr.mxu0 0.0
    %723 = vmatpush1.msra.mxu0 0.0
    %724 = vmatprep.subr.mxu0 0.0
    %725 = vmatpush1.msra.mxu0 0.0
    %726 = vmatprep.subr.mxu0 0.0
    %727 = vmatpush1.msra.mxu0 0.0
    %728 = vmatprep.subr.mxu0 0.0
    %729 = vmatpush1.msra.mxu0 0.0
    %730 = vmatprep.subr.mxu0 0.0
    %731 = vmatpush1.msra.mxu0 0.0
    %732 = vmatprep.subr.mxu0 0.0
    %733 = vmatpush1.msra.mxu0 0.0
    %734 = vmatprep.subr.mxu0 0.0
    %735 = vmatpush1.msra.mxu0 0.0
    %736 = vmatprep.subr.mxu0 0.0
    %737 = vmatpush1.msra.mxu0 0.0
    %738 = vmatprep.subr.mxu0 0.0
    %739 = vmatpush1.msra.mxu0 0.0
    %740 = vmatprep.subr.mxu0 0.0
    %741 = vmatpush1.msra.mxu0 0.0
    %742 = vmatprep.subr.mxu0 0.0
    %743 = vmatpush1.msra.mxu0 0.0
    %744 = vmatprep.subr.mxu0 0.0
    %745 = vmatpush1.msra.mxu0 0.0
    %746 = vmatprep.mubr.f32.mxu0 0.0
    %747 = vmatmul.mubr.f32.gmra.mrb[0].mxu0 %v659
    %v748 = vpop.f32.mrb[0].mxu0
    %v749 = vadd.f32 0.0, %v748
    %v750 = vpop.f32.mrb[0].mxu0
    %751 = vmatprep.mubr.f32.mxu0 0.0
    %752 = vmatmul.mubr.f32.gmra.mrb[0].mxu0 %v662
    %v753 = vpop.f32.mrb[0].mxu0
    %v754 = vadd.f32 0.0, %v753
    %v755 = vpop.f32.mrb[0].mxu0
    %756 = vmatprep.mubr.f32.mxu0 0.0
    %757 = vmatmul.mubr.f32.gmra.mrb[0].mxu0 %v665
    %v758 = vpop.f32.mrb[0].mxu0
    %v759 = vadd.f32 0.0, %v758
    %v760 = vpop.f32.mrb[0].mxu0
    %761 = vmatprep.mubr.f32.mxu0 0.0
    %762 = vmatmul.mubr.f32.gmra.mrb[0].mxu0 %v668
    %v763 = vpop.f32.mrb[0].mxu0
    %v764 = vadd.f32 0.0, %v763
    %v765 = vpop.f32.mrb[0].mxu0
    %766 = vmatprep.mubr.f32.mxu0 0.0
    %767 = vmatmul.mubr.f32.gmra.mrb[0].mxu0 %v671
    %v768 = vpop.f32.mrb[0].mxu0
    %v769 = vadd.f32 0.0, %v768
    %v770 = vpop.f32.mrb[0].mxu0
    %771 = vmatprep.mubr.f32.mxu0 0.0
    %772 = vmatmul.mubr.f32.gmra.mrb[0].mxu0 %v674
    %v773 = vpop.f32.mrb[0].mxu0
    %v774 = vadd.f32 0.0, %v773
    %v775 = vpop.f32.mrb[0].mxu0
    %776 = vmatprep.mubr.f32.mxu0 0.0
    %777 = vmatmul.mubr.f32.gmra.mrb[0].mxu0 %v677
    %v778 = vpop.f32.mrb[0].mxu0
    %v779 = vadd.f32 0.0, %v778
    %v780 = vpop.f32.mrb[0].mxu0
    %781 = vmatprep.mubr.f32.mxu0 0.0
    %782 = vmatmul.mubr.f32.gmra.mrb[0].mxu0 %v680
    %v783 = vpop.f32.mrb[0].mxu0
    %v784 = vadd.f32 0.0, %v783
    %v785 = vpop.f32.mrb[0].mxu0
    %786 = vdwg.mxu0
    %v787 = vmul.f32 %v749, %v309
    %v788 = vmul.f32 %v754, %v311
    %v789 = vmul.f32 %v759, %v313
    %v790 = vmul.f32 %v764, %v315
    %v791 = vmul.f32 %v769, %v317
    %v792 = vmul.f32 %v774, %v319
    %v793 = vmul.f32 %v779, %v321
    %v794 = vmul.f32 %v784, %v323
    %vm795 = vcmp.ge.f32.partialorder %v787, 0.0
    %vm796 = vcmp.ge.f32.partialorder %v788, 0.0
    %vm797 = vcmp.ge.f32.partialorder %v789, 0.0
    %vm798 = vcmp.ge.f32.partialorder %v790, 0.0
    %vm799 = vcmp.ge.f32.partialorder %v791, 0.0
    %vm800 = vcmp.ge.f32.partialorder %v792, 0.0
    %vm801 = vcmp.ge.f32.partialorder %v793, 0.0
    %vm802 = vcmp.ge.f32.partialorder %v794, 0.0
    %v803 = vmul.f32 %v787, 0.01
    %v804 = vmul.f32 %v788, 0.01
    %v805 = vmul.f32 %v789, 0.01
    %v806 = vmul.f32 %v790, 0.01
    %v807 = vmul.f32 %v791, 0.01
    %v808 = vmul.f32 %v792, 0.01
    %v809 = vmul.f32 %v793, 0.01
    %v810 = vmul.f32 %v794, 0.01
    %v811 = vsel %vm795, %v787, %v803
    %v812 = vsel %vm796, %v788, %v804
    %v813 = vsel %vm797, %v789, %v805
    %v814 = vsel %vm798, %v790, %v806
    %v815 = vsel %vm799, %v791, %v807
    %v816 = vsel %vm800, %v792, %v808
    %v817 = vsel %vm801, %v793, %v809
    %v818 = vsel %vm802, %v794, %v810
    %v819 = vld [vmem:[%s5] sm:$0xff]
    %v820 = vld [vmem:[%s5 + $0x8] sm:$0xff]
    %v821 = vld [vmem:[%s5 + $0x10] sm:$0xff]
    %v822 = vld [vmem:[%s5 + $0x18] sm:$0xff]
    %v823 = vld [vmem:[%s6] sm:$0x1]
    %v825 = vlaneseq
    %v826 = vshrl.u32 %v825, 7
    %v827 = vsub.s32 0, %v826
    %v828 = vrot.slane %v823, %v827
    %v831 = vsel %vm367, %v811, 0
    %v834 = vsel %vm367, %v812, 0
    %v837 = vsel %vm367, %v813, 0
    %v840 = vsel %vm367, %v814, 0
    %v843 = vsel %vm367, %v815, 0
    %v846 = vsel %vm367, %v816, 0
    %v849 = vsel %vm367, %v817, 0
    %v852 = vsel %vm367, %v818, 0
    %854 = vmatprep.subr.mxu0 0.0
    %855 = vmatpush1.msra.mxu0 %v819
    %856 = vmatprep.subr.mxu0 0.0
    %857 = vmatpush1.msra.mxu0 %v820
    %858 = vmatprep.subr.mxu0 0.0
    %859 = vmatpush1.msra.mxu0 %v821
    %860 = vmatprep.subr.mxu0 0.0
    %861 = vmatpush1.msra.mxu0 %v822
    %862 = vmatprep.subr.mxu0 0.0
    %863 = vmatpush1.msra.mxu0 0.0
    %864 = vmatprep.subr.mxu0 0.0
    %865 = vmatpush1.msra.mxu0 0.0
    %866 = vmatprep.subr.mxu0 0.0
    %867 = vmatpush1.msra.mxu0 0.0
    %868 = vmatprep.subr.mxu0 0.0
    %869 = vmatpush1.msra.mxu0 0.0
    %870 = vmatprep.subr.mxu0 0.0
    %871 = vmatpush1.msra.mxu0 0.0
    %872 = vmatprep.subr.mxu0 0.0
    %873 = vmatpush1.msra.mxu0 0.0
    %874 = vmatprep.subr.mxu0 0.0
    %875 = vmatpush1.msra.mxu0 0.0
    %876 = vmatprep.subr.mxu0 0.0
    %877 = vmatpush1.msra.mxu0 0.0
    %878 = vmatprep.subr.mxu0 0.0
    %879 = vmatpush1.msra.mxu0 0.0
    %880 = vmatprep.subr.mxu0 0.0
    %881 = vmatpush1.msra.mxu0 0.0
    %882 = vmatprep.subr.mxu0 0.0
    %883 = vmatpush1.msra.mxu0 0.0
    %884 = vmatprep.subr.mxu0 0.0
    %885 = vmatpush1.msra.mxu0 0.0
    %886 = vmatprep.subr.mxu0 0.0
    %887 = vmatpush1.msra.mxu0 0.0
    %888 = vmatprep.subr.mxu0 0.0
    %889 = vmatpush1.msra.mxu0 0.0
    %890 = vmatprep.subr.mxu0 0.0
    %891 = vmatpush1.msra.mxu0 0.0
    %892 = vmatprep.subr.mxu0 0.0
    %893 = vmatpush1.msra.mxu0 0.0
    %894 = vmatprep.subr.mxu0 0.0
    %895 = vmatpush1.msra.mxu0 0.0
    %896 = vmatprep.subr.mxu0 0.0
    %897 = vmatpush1.msra.mxu0 0.0
    %898 = vmatprep.subr.mxu0 0.0
    %899 = vmatpush1.msra.mxu0 0.0
    %900 = vmatprep.subr.mxu0 0.0
    %901 = vmatpush1.msra.mxu0 0.0
    %902 = vmatprep.subr.mxu0 0.0
    %903 = vmatpush1.msra.mxu0 0.0
    %904 = vmatprep.subr.mxu0 0.0
    %905 = vmatpush1.msra.mxu0 0.0
    %906 = vmatprep.subr.mxu0 0.0
    %907 = vmatpush1.msra.mxu0 0.0
    %908 = vmatprep.subr.mxu0 0.0
    %909 = vmatpush1.msra.mxu0 0.0
    %910 = vmatprep.subr.mxu0 0.0
    %911 = vmatpush1.msra.mxu0 0.0
    %912 = vmatprep.subr.mxu0 0.0
    %913 = vmatpush1.msra.mxu0 0.0
    %914 = vmatprep.subr.mxu0 0.0
    %915 = vmatpush1.msra.mxu0 0.0
    %916 = vmatprep.subr.mxu0 0.0
    %917 = vmatpush1.msra.mxu0 0.0
    %918 = vmatprep.mubr.f32.mxu0 0.0
    %919 = vmatmul.mubr.f32.gmra.mrb[0].mxu0 %v831
    %v920 = vpop.f32.mrb[0].mxu0
    %v921 = vadd.f32 %v828, %v920
    %v922 = vpop.f32.mrb[0].mxu0
    %923 = vmatprep.mubr.f32.mxu0 0.0
    %924 = vmatmul.mubr.f32.gmra.mrb[0].mxu0 %v834
    %v925 = vpop.f32.mrb[0].mxu0
    %v926 = vadd.f32 %v828, %v925
    %v927 = vpop.f32.mrb[0].mxu0
    %928 = vmatprep.mubr.f32.mxu0 0.0
    %929 = vmatmul.mubr.f32.gmra.mrb[0].mxu0 %v837
    %v930 = vpop.f32.mrb[0].mxu0
    %v931 = vadd.f32 %v828, %v930
    %v932 = vpop.f32.mrb[0].mxu0
    %933 = vmatprep.mubr.f32.mxu0 0.0
    %934 = vmatmul.mubr.f32.gmra.mrb[0].mxu0 %v840
    %v935 = vpop.f32.mrb[0].mxu0
    %v936 = vadd.f32 %v828, %v935
    %v937 = vpop.f32.mrb[0].mxu0
    %938 = vmatprep.mubr.f32.mxu0 0.0
    %939 = vmatmul.mubr.f32.gmra.mrb[0].mxu0 %v843
    %v940 = vpop.f32.mrb[0].mxu0
    %v941 = vadd.f32 %v828, %v940
    %v942 = vpop.f32.mrb[0].mxu0
    %943 = vmatprep.mubr.f32.mxu0 0.0
    %944 = vmatmul.mubr.f32.gmra.mrb[0].mxu0 %v846
    %v945 = vpop.f32.mrb[0].mxu0
    %v946 = vadd.f32 %v828, %v945
    %v947 = vpop.f32.mrb[0].mxu0
    %948 = vmatprep.mubr.f32.mxu0 0.0
    %949 = vmatmul.mubr.f32.gmra.mrb[0].mxu0 %v849
    %v950 = vpop.f32.mrb[0].mxu0
    %v951 = vadd.f32 %v828, %v950
    %v952 = vpop.f32.mrb[0].mxu0
    %953 = vmatprep.mubr.f32.mxu0 0.0
    %954 = vmatmul.mubr.f32.gmra.mrb[0].mxu0 %v852
    %v955 = vpop.f32.mrb[0].mxu0
    %v956 = vadd.f32 %v828, %v955
    %v957 = vpop.f32.mrb[0].mxu0
    %958 = vdwg.mxu0
    %v959 = vmul.f32 %v500, %v921
    %v960 = vmul.f32 %v505, %v926
    %v961 = vmul.f32 %v510, %v931
    %v962 = vmul.f32 %v515, %v936
    %v963 = vmul.f32 %v520, %v941
    %v964 = vmul.f32 %v525, %v946
    %v965 = vmul.f32 %v530, %v951
    %v966 = vmul.f32 %v535, %v956
    %967 = vmatprep.subr.mxu0 0.0
    %968 = vmatpush1.msra.mxu0 %v959
    %969 = vmatprep.subr.mxu0 0.0
    %970 = vmatpush1.msra.mxu0 %v960
    %971 = vmatprep.subr.mxu0 0.0
    %972 = vmatpush1.msra.mxu0 %v961
    %973 = vmatprep.subr.mxu0 0.0
    %974 = vmatpush1.msra.mxu0 %v962
    %975 = vmatprep.subr.mxu0 0.0
    %976 = vmatpush1.msra.mxu0 %v963
    %977 = vmatprep.subr.mxu0 0.0
    %978 = vmatpush1.msra.mxu0 %v964
    %979 = vmatprep.subr.mxu0 0.0
    %980 = vmatpush1.msra.mxu0 %v965
    %981 = vmatprep.subr.mxu0 0.0
    %982 = vmatpush1.msra.mxu0 %v966
    %983 = vmatprep.subr.mxu0 0.0
    %984 = vmatpush1.msra.mxu0 0.0
    %985 = vmatprep.subr.mxu0 0.0
    %986 = vmatpush1.msra.mxu0 0.0
    %987 = vmatprep.subr.mxu0 0.0
    %988 = vmatpush1.msra.mxu0 0.0
    %989 = vmatprep.subr.mxu0 0.0
    %990 = vmatpush1.msra.mxu0 0.0
    %991 = vmatprep.subr.mxu0 0.0
    %992 = vmatpush1.msra.mxu0 0.0
    %993 = vmatprep.subr.mxu0 0.0
    %994 = vmatpush1.msra.mxu0 0.0
    %995 = vmatprep.subr.mxu0 0.0
    %996 = vmatpush1.msra.mxu0 0.0
    %997 = vmatprep.subr.mxu0 0.0
    %998 = vmatpush1.msra.mxu0 0.0
    %999 = vmatprep.subr.mxu0 0.0
    %1000 = vmatpush1.msra.mxu0 0.0
    %1001 = vmatprep.subr.mxu0 0.0
    %1002 = vmatpush1.msra.mxu0 0.0
    %1003 = vmatprep.subr.mxu0 0.0
    %1004 = vmatpush1.msra.mxu0 0.0
    %1005 = vmatprep.subr.mxu0 0.0
    %1006 = vmatpush1.msra.mxu0 0.0
    %1007 = vmatprep.subr.mxu0 0.0
    %1008 = vmatpush1.msra.mxu0 0.0
    %1009 = vmatprep.subr.mxu0 0.0
    %1010 = vmatpush1.msra.mxu0 0.0
    %1011 = vmatprep.subr.mxu0 0.0
    %1012 = vmatpush1.msra.mxu0 0.0
    %1013 = vmatprep.subr.mxu0 0.0
    %1014 = vmatpush1.msra.mxu0 0.0
    %1015 = vmatprep.subr.mxu0 0.0
    %1016 = vmatpush1.msra.mxu0 0.0
    %1017 = vmatprep.subr.mxu0 0.0
    %1018 = vmatpush1.msra.mxu0 0.0
    %1019 = vmatprep.subr.mxu0 0.0
    %1020 = vmatpush1.msra.mxu0 0.0
    %1021 = vmatprep.subr.mxu0 0.0
    %1022 = vmatpush1.msra.mxu0 0.0
    %1023 = vmatprep.subr.mxu0 0.0
    %1024 = vmatpush1.msra.mxu0 0.0
    %1025 = vmatprep.subr.mxu0 0.0
    %1026 = vmatpush1.msra.mxu0 0.0
    %1027 = vmatprep.subr.mxu0 0.0
    %1028 = vmatpush1.msra.mxu0 0.0
    %1029 = vmatprep.subr.mxu0 0.0
    %1030 = vmatpush1.msra.mxu0 0.0
    %1031 = vmatprep.mubr.f32.mxu0 0.0
    %1032 = vmatmul.mubr.f32.gmra.mrb[0].mxu0 %v140
    %v1033 = vpop.f32.mrb[0].mxu0
    %v1034 = vadd.f32 %v959, %v1033
    %v1035 = vpop.f32.mrb[0].mxu0
    %1036 = vmatprep.mubr.f32.mxu0 0.0
    %1037 = vmatmul.mubr.f32.gmra.mrb[0].mxu0 %v143
    %v1038 = vpop.f32.mrb[0].mxu0
    %v1039 = vadd.f32 %v960, %v1038
    %v1040 = vpop.f32.mrb[0].mxu0
    %1041 = vmatprep.mubr.f32.mxu0 0.0
    %1042 = vmatmul.mubr.f32.gmra.mrb[0].mxu0 %v146
    %v1043 = vpop.f32.mrb[0].mxu0
    %v1044 = vadd.f32 %v961, %v1043
    %v1045 = vpop.f32.mrb[0].mxu0
    %1046 = vmatprep.mubr.f32.mxu0 0.0
    %1047 = vmatmul.mubr.f32.gmra.mrb[0].mxu0 %v149
    %v1048 = vpop.f32.mrb[0].mxu0
    %v1049 = vadd.f32 %v962, %v1048
    %v1050 = vpop.f32.mrb[0].mxu0
    %1051 = vmatprep.mubr.f32.mxu0 0.0
    %1052 = vmatmul.mubr.f32.gmra.mrb[0].mxu0 %v152
    %v1053 = vpop.f32.mrb[0].mxu0
    %v1054 = vadd.f32 %v963, %v1053
    %v1055 = vpop.f32.mrb[0].mxu0
    %1056 = vmatprep.mubr.f32.mxu0 0.0
    %1057 = vmatmul.mubr.f32.gmra.mrb[0].mxu0 %v155
    %v1058 = vpop.f32.mrb[0].mxu0
    %v1059 = vadd.f32 %v964, %v1058
    %v1060 = vpop.f32.mrb[0].mxu0
    %1061 = vmatprep.mubr.f32.mxu0 0.0
    %1062 = vmatmul.mubr.f32.gmra.mrb[0].mxu0 %v158
    %v1063 = vpop.f32.mrb[0].mxu0
    %v1064 = vadd.f32 %v965, %v1063
    %v1065 = vpop.f32.mrb[0].mxu0
    %1066 = vmatprep.mubr.f32.mxu0 0.0
    %1067 = vmatmul.mubr.f32.gmra.mrb[0].mxu0 %v161
    %v1068 = vpop.f32.mrb[0].mxu0
    %v1069 = vadd.f32 %v966, %v1068
    %v1070 = vpop.f32.mrb[0].mxu0
    %1071 = vdwg.mxu0
    %v1072 = vmul.f32 %v500, %v1034
    %v1073 = vmul.f32 %v505, %v1039
    %v1074 = vmul.f32 %v510, %v1044
    %v1075 = vmul.f32 %v515, %v1049
    %v1076 = vmul.f32 %v520, %v1054
    %v1077 = vmul.f32 %v525, %v1059
    %v1078 = vmul.f32 %v530, %v1064
    %v1079 = vmul.f32 %v535, %v1069
    %1080 = vmatprep.subr.mxu0 0.0
    %1081 = vmatpush1.msra.mxu0 %v1072
    %1082 = vmatprep.subr.mxu0 0.0
    %1083 = vmatpush1.msra.mxu0 %v1073
    %1084 = vmatprep.subr.mxu0 0.0
    %1085 = vmatpush1.msra.mxu0 %v1074
    %1086 = vmatprep.subr.mxu0 0.0
    %1087 = vmatpush1.msra.mxu0 %v1075
    %1088 = vmatprep.subr.mxu0 0.0
    %1089 = vmatpush1.msra.mxu0 %v1076
    %1090 = vmatprep.subr.mxu0 0.0
    %1091 = vmatpush1.msra.mxu0 %v1077
    %1092 = vmatprep.subr.mxu0 0.0
    %1093 = vmatpush1.msra.mxu0 %v1078
    %1094 = vmatprep.subr.mxu0 0.0
    %1095 = vmatpush1.msra.mxu0 %v1079
    %1096 = vmatprep.subr.mxu0 0.0
    %1097 = vmatpush1.msra.mxu0 0.0
    %1098 = vmatprep.subr.mxu0 0.0
    %1099 = vmatpush1.msra.mxu0 0.0
    %1100 = vmatprep.subr.mxu0 0.0
    %1101 = vmatpush1.msra.mxu0 0.0
    %1102 = vmatprep.subr.mxu0 0.0
    %1103 = vmatpush1.msra.mxu0 0.0
    %1104 = vmatprep.subr.mxu0 0.0
    %1105 = vmatpush1.msra.mxu0 0.0
    %1106 = vmatprep.subr.mxu0 0.0
    %1107 = vmatpush1.msra.mxu0 0.0
    %1108 = vmatprep.subr.mxu0 0.0
    %1109 = vmatpush1.msra.mxu0 0.0
    %1110 = vmatprep.subr.mxu0 0.0
    %1111 = vmatpush1.msra.mxu0 0.0
    %1112 = vmatprep.subr.mxu0 0.0
    %1113 = vmatpush1.msra.mxu0 0.0
    %1114 = vmatprep.subr.mxu0 0.0
    %1115 = vmatpush1.msra.mxu0 0.0
    %1116 = vmatprep.subr.mxu0 0.0
    %1117 = vmatpush1.msra.mxu0 0.0
    %1118 = vmatprep.subr.mxu0 0.0
    %1119 = vmatpush1.msra.mxu0 0.0
    %1120 = vmatprep.subr.mxu0 0.0
    %1121 = vmatpush1.msra.mxu0 0.0
    %1122 = vmatprep.subr.mxu0 0.0
    %1123 = vmatpush1.msra.mxu0 0.0
    %1124 = vmatprep.subr.mxu0 0.0
    %1125 = vmatpush1.msra.mxu0 0.0
    %1126 = vmatprep.subr.mxu0 0.0
    %1127 = vmatpush1.msra.mxu0 0.0
    %1128 = vmatprep.subr.mxu0 0.0
    %1129 = vmatpush1.msra.mxu0 0.0
    %1130 = vmatprep.subr.mxu0 0.0
    %1131 = vmatpush1.msra.mxu0 0.0
    %1132 = vmatprep.subr.mxu0 0.0
    %1133 = vmatpush1.msra.mxu0 0.0
    %1134 = vmatprep.subr.mxu0 0.0
    %1135 = vmatpush1.msra.mxu0 0.0
    %1136 = vmatprep.subr.mxu0 0.0
    %1137 = vmatpush1.msra.mxu0 0.0
    %1138 = vmatprep.subr.mxu0 0.0
    %1139 = vmatpush1.msra.mxu0 0.0
    %1140 = vmatprep.subr.mxu0 0.0
    %1141 = vmatpush1.msra.mxu0 0.0
    %1142 = vmatprep.subr.mxu0 0.0
    %1143 = vmatpush1.msra.mxu0 0.0
    %1144 = vmatprep.mubr.f32.mxu0 0.0
    %1145 = vmatmul.mubr.f32.gmra.mrb[0].mxu0 %v659
    %v1146 = vpop.f32.mrb[0].mxu0
    %v1147 = vadd.f32 0.0, %v1146
    %v1148 = vpop.f32.mrb[0].mxu0
    %1149 = vmatprep.mubr.f32.mxu0 0.0
    %1150 = vmatmul.mubr.f32.gmra.mrb[0].mxu0 %v662
    %v1151 = vpop.f32.mrb[0].mxu0
    %v1152 = vadd.f32 0.0, %v1151
    %v1153 = vpop.f32.mrb[0].mxu0
    %1154 = vmatprep.mubr.f32.mxu0 0.0
    %1155 = vmatmul.mubr.f32.gmra.mrb[0].mxu0 %v665
    %v1156 = vpop.f32.mrb[0].mxu0
    %v1157 = vadd.f32 0.0, %v1156
    %v1158 = vpop.f32.mrb[0].mxu0
    %1159 = vmatprep.mubr.f32.mxu0 0.0
    %1160 = vmatmul.mubr.f32.gmra.mrb[0].mxu0 %v668
    %v1161 = vpop.f32.mrb[0].mxu0
    %v1162 = vadd.f32 0.0, %v1161
    %v1163 = vpop.f32.mrb[0].mxu0
    %1164 = vmatprep.mubr.f32.mxu0 0.0
    %1165 = vmatmul.mubr.f32.gmra.mrb[0].mxu0 %v671
    %v1166 = vpop.f32.mrb[0].mxu0
    %v1167 = vadd.f32 0.0, %v1166
    %v1168 = vpop.f32.mrb[0].mxu0
    %1169 = vmatprep.mubr.f32.mxu0 0.0
    %1170 = vmatmul.mubr.f32.gmra.mrb[0].mxu0 %v674
    %v1171 = vpop.f32.mrb[0].mxu0
    %v1172 = vadd.f32 0.0, %v1171
    %v1173 = vpop.f32.mrb[0].mxu0
    %1174 = vmatprep.mubr.f32.mxu0 0.0
    %1175 = vmatmul.mubr.f32.gmra.mrb[0].mxu0 %v677
    %v1176 = vpop.f32.mrb[0].mxu0
    %v1177 = vadd.f32 0.0, %v1176
    %v1178 = vpop.f32.mrb[0].mxu0
    %1179 = vmatprep.mubr.f32.mxu0 0.0
    %1180 = vmatmul.mubr.f32.gmra.mrb[0].mxu0 %v680
    %v1181 = vpop.f32.mrb[0].mxu0
    %v1182 = vadd.f32 0.0, %v1181
    %v1183 = vpop.f32.mrb[0].mxu0
    %1184 = vdwg.mxu0
    %v1185 = vmul.f32 %v1147, %v309
    %v1186 = vmul.f32 %v1152, %v311
    %v1187 = vmul.f32 %v1157, %v313
    %v1188 = vmul.f32 %v1162, %v315
    %v1189 = vmul.f32 %v1167, %v317
    %v1190 = vmul.f32 %v1172, %v319
    %v1191 = vmul.f32 %v1177, %v321
    %v1192 = vmul.f32 %v1182, %v323
    %vm1193 = vcmp.ge.f32.partialorder %v1185, 0.0
    %vm1194 = vcmp.ge.f32.partialorder %v1186, 0.0
    %vm1195 = vcmp.ge.f32.partialorder %v1187, 0.0
    %vm1196 = vcmp.ge.f32.partialorder %v1188, 0.0
    %vm1197 = vcmp.ge.f32.partialorder %v1189, 0.0
    %vm1198 = vcmp.ge.f32.partialorder %v1190, 0.0
    %vm1199 = vcmp.ge.f32.partialorder %v1191, 0.0
    %vm1200 = vcmp.ge.f32.partialorder %v1192, 0.0
    %v1201 = vmul.f32 %v1185, 0.01
    %v1202 = vmul.f32 %v1186, 0.01
    %v1203 = vmul.f32 %v1187, 0.01
    %v1204 = vmul.f32 %v1188, 0.01
    %v1205 = vmul.f32 %v1189, 0.01
    %v1206 = vmul.f32 %v1190, 0.01
    %v1207 = vmul.f32 %v1191, 0.01
    %v1208 = vmul.f32 %v1192, 0.01
    %v1209 = vsel %vm1193, %v1185, %v1201
    %v1210 = vsel %vm1194, %v1186, %v1202
    %v1211 = vsel %vm1195, %v1187, %v1203
    %v1212 = vsel %vm1196, %v1188, %v1204
    %v1213 = vsel %vm1197, %v1189, %v1205
    %v1214 = vsel %vm1198, %v1190, %v1206
    %v1215 = vsel %vm1199, %v1191, %v1207
    %v1216 = vsel %vm1200, %v1192, %v1208
    %v1217 = vld [vmem:[%s1] sm:$0xff]
    %v1218 = vld [vmem:[%s1 + $0x8] sm:$0xff]
    %v1219 = vld [vmem:[%s1 + $0x10] sm:$0xff]
    %v1220 = vld [vmem:[%s1 + $0x18] sm:$0xff]
    %v1221 = vld [vmem:[%s1 + $0x20] sm:$0xff]
    %v1222 = vld [vmem:[%s1 + $0x28] sm:$0xff]
    %v1223 = vld [vmem:[%s1 + $0x30] sm:$0xff]
    %v1224 = vld [vmem:[%s1 + $0x38] sm:$0xff]
    %v1225 = vld [vmem:[%s7] sm:$0xff]
    %v1226 = vld [vmem:[%s7 + $0x8] sm:$0xff]
    %v1227 = vld [vmem:[%s7 + $0x10] sm:$0xff]
    %v1228 = vld [vmem:[%s7 + $0x18] sm:$0xff]
    %v1229 = vld [vmem:[%s8] sm:$0x1]
    %v1231 = vlaneseq
    %v1232 = vshrl.u32 %v1231, 7
    %v1233 = vsub.s32 0, %v1232
    %v1234 = vrot.slane %v1229, %v1233
    %v1237 = vsel %vm367, %v1217, 0
    %v1240 = vsel %vm367, %v1218, 0
    %v1243 = vsel %vm367, %v1219, 0
    %v1246 = vsel %vm367, %v1220, 0
    %v1249 = vsel %vm367, %v1221, 0
    %v1252 = vsel %vm367, %v1222, 0
    %v1255 = vsel %vm367, %v1223, 0
    %v1258 = vsel %vm367, %v1224, 0
    %1260 = vmatprep.subr.mxu0 0.0
    %1261 = vmatpush1.msra.mxu0 %v1225
    %1262 = vmatprep.subr.mxu0 0.0
    %1263 = vmatpush1.msra.mxu0 %v1226
    %1264 = vmatprep.subr.mxu0 0.0
    %1265 = vmatpush1.msra.mxu0 %v1227
    %1266 = vmatprep.subr.mxu0 0.0
    %1267 = vmatpush1.msra.mxu0 %v1228
    %1268 = vmatprep.subr.mxu0 0.0
    %1269 = vmatpush1.msra.mxu0 0.0
    %1270 = vmatprep.subr.mxu0 0.0
    %1271 = vmatpush1.msra.mxu0 0.0
    %1272 = vmatprep.subr.mxu0 0.0
    %1273 = vmatpush1.msra.mxu0 0.0
    %1274 = vmatprep.subr.mxu0 0.0
    %1275 = vmatpush1.msra.mxu0 0.0
    %1276 = vmatprep.subr.mxu0 0.0
    %1277 = vmatpush1.msra.mxu0 0.0
    %1278 = vmatprep.subr.mxu0 0.0
    %1279 = vmatpush1.msra.mxu0 0.0
    %1280 = vmatprep.subr.mxu0 0.0
    %1281 = vmatpush1.msra.mxu0 0.0
    %1282 = vmatprep.subr.mxu0 0.0
    %1283 = vmatpush1.msra.mxu0 0.0
    %1284 = vmatprep.subr.mxu0 0.0
    %1285 = vmatpush1.msra.mxu0 0.0
    %1286 = vmatprep.subr.mxu0 0.0
    %1287 = vmatpush1.msra.mxu0 0.0
    %1288 = vmatprep.subr.mxu0 0.0
    %1289 = vmatpush1.msra.mxu0 0.0
    %1290 = vmatprep.subr.mxu0 0.0
    %1291 = vmatpush1.msra.mxu0 0.0
    %1292 = vmatprep.subr.mxu0 0.0
    %1293 = vmatpush1.msra.mxu0 0.0
    %1294 = vmatprep.subr.mxu0 0.0
    %1295 = vmatpush1.msra.mxu0 0.0
    %1296 = vmatprep.subr.mxu0 0.0
    %1297 = vmatpush1.msra.mxu0 0.0
    %1298 = vmatprep.subr.mxu0 0.0
    %1299 = vmatpush1.msra.mxu0 0.0
    %1300 = vmatprep.subr.mxu0 0.0
    %1301 = vmatpush1.msra.mxu0 0.0
    %1302 = vmatprep.subr.mxu0 0.0
    %1303 = vmatpush1.msra.mxu0 0.0
    %1304 = vmatprep.subr.mxu0 0.0
    %1305 = vmatpush1.msra.mxu0 0.0
    %1306 = vmatprep.subr.mxu0 0.0
    %1307 = vmatpush1.msra.mxu0 0.0
    %1308 = vmatprep.subr.mxu0 0.0
    %1309 = vmatpush1.msra.mxu0 0.0
    %1310 = vmatprep.subr.mxu0 0.0
    %1311 = vmatpush1.msra.mxu0 0.0
    %1312 = vmatprep.subr.mxu0 0.0
    %1313 = vmatpush1.msra.mxu0 0.0
    %1314 = vmatprep.subr.mxu0 0.0
    %1315 = vmatpush1.msra.mxu0 0.0
    %1316 = vmatprep.subr.mxu0 0.0
    %1317 = vmatpush1.msra.mxu0 0.0
    %1318 = vmatprep.subr.mxu0 0.0
    %1319 = vmatpush1.msra.mxu0 0.0
    %1320 = vmatprep.subr.mxu0 0.0
    %1321 = vmatpush1.msra.mxu0 0.0
    %1322 = vmatprep.subr.mxu0 0.0
    %1323 = vmatpush1.msra.mxu0 0.0
    %1324 = vmatprep.mubr.f32.mxu0 0.0
    %1325 = vmatmul.mubr.f32.gmra.mrb[0].mxu0 %v1237
    %v1326 = vpop.f32.mrb[0].mxu0
    %v1327 = vadd.f32 %v1234, %v1326
    %v1328 = vpop.f32.mrb[0].mxu0
    %1329 = vmatprep.mubr.f32.mxu0 0.0
    %1330 = vmatmul.mubr.f32.gmra.mrb[0].mxu0 %v1240
    %v1331 = vpop.f32.mrb[0].mxu0
    %v1332 = vadd.f32 %v1234, %v1331
    %v1333 = vpop.f32.mrb[0].mxu0
    %1334 = vmatprep.mubr.f32.mxu0 0.0
    %1335 = vmatmul.mubr.f32.gmra.mrb[0].mxu0 %v1243
    %v1336 = vpop.f32.mrb[0].mxu0
    %v1337 = vadd.f32 %v1234, %v1336
    %v1338 = vpop.f32.mrb[0].mxu0
    %1339 = vmatprep.mubr.f32.mxu0 0.0
    %1340 = vmatmul.mubr.f32.gmra.mrb[0].mxu0 %v1246
    %v1341 = vpop.f32.mrb[0].mxu0
    %v1342 = vadd.f32 %v1234, %v1341
    %v1343 = vpop.f32.mrb[0].mxu0
    %1344 = vmatprep.mubr.f32.mxu0 0.0
    %1345 = vmatmul.mubr.f32.gmra.mrb[0].mxu0 %v1249
    %v1346 = vpop.f32.mrb[0].mxu0
    %v1347 = vadd.f32 %v1234, %v1346
    %v1348 = vpop.f32.mrb[0].mxu0
    %1349 = vmatprep.mubr.f32.mxu0 0.0
    %1350 = vmatmul.mubr.f32.gmra.mrb[0].mxu0 %v1252
    %v1351 = vpop.f32.mrb[0].mxu0
    %v1352 = vadd.f32 %v1234, %v1351
    %v1353 = vpop.f32.mrb[0].mxu0
    %1354 = vmatprep.mubr.f32.mxu0 0.0
    %1355 = vmatmul.mubr.f32.gmra.mrb[0].mxu0 %v1255
    %v1356 = vpop.f32.mrb[0].mxu0
    %v1357 = vadd.f32 %v1234, %v1356
    %v1358 = vpop.f32.mrb[0].mxu0
    %1359 = vmatprep.mubr.f32.mxu0 0.0
    %1360 = vmatmul.mubr.f32.gmra.mrb[0].mxu0 %v1258
    %v1361 = vpop.f32.mrb[0].mxu0
    %v1362 = vadd.f32 %v1234, %v1361
    %v1363 = vpop.f32.mrb[0].mxu0
    %1364 = vdwg.mxu0
    %v1365 = vmul.f32 %v292, %v1327
    %v1366 = vmul.f32 %v293, %v1332
    %v1367 = vmul.f32 %v294, %v1337
    %v1368 = vmul.f32 %v295, %v1342
    %v1369 = vmul.f32 %v296, %v1347
    %v1370 = vmul.f32 %v297, %v1352
    %v1371 = vmul.f32 %v298, %v1357
    %v1372 = vmul.f32 %v299, %v1362
    %v1374 = vsel %vm82, %v74, 0
    %v1377 = vsel %vm82, %v75, 0
    %v1380 = vsel %vm82, %v76, 0
    %v1383 = vsel %vm82, %v77, 0
    %v1386 = vsel %vm82, %v78, 0
    %v1389 = vsel %vm82, %v79, 0
    %v1392 = vsel %vm82, %v80, 0
    %v1395 = vsel %vm82, %v81, 0
    %1397 = vmatprep.subr.mxu0 0.0
    %1398 = vmatpush1.msra.mxu0 %v1365
    %1399 = vmatprep.subr.mxu0 0.0
    %1400 = vmatpush1.msra.mxu0 %v1366
    %1401 = vmatprep.subr.mxu0 0.0
    %1402 = vmatpush1.msra.mxu0 %v1367
    %1403 = vmatprep.subr.mxu0 0.0
    %1404 = vmatpush1.msra.mxu0 %v1368
    %1405 = vmatprep.subr.mxu0 0.0
    %1406 = vmatpush1.msra.mxu0 %v1369
    %1407 = vmatprep.subr.mxu0 0.0
    %1408 = vmatpush1.msra.mxu0 %v1370
    %1409 = vmatprep.subr.mxu0 0.0
    %1410 = vmatpush1.msra.mxu0 %v1371
    %1411 = vmatprep.subr.mxu0 0.0
    %1412 = vmatpush1.msra.mxu0 %v1372
    %1413 = vmatprep.subr.mxu0 0.0
    %1414 = vmatpush1.msra.mxu0 0.0
    %1415 = vmatprep.subr.mxu0 0.0
    %1416 = vmatpush1.msra.mxu0 0.0
    %1417 = vmatprep.subr.mxu0 0.0
    %1418 = vmatpush1.msra.mxu0 0.0
    %1419 = vmatprep.subr.mxu0 0.0
    %1420 = vmatpush1.msra.mxu0 0.0
    %1421 = vmatprep.subr.mxu0 0.0
    %1422 = vmatpush1.msra.mxu0 0.0
    %1423 = vmatprep.subr.mxu0 0.0
    %1424 = vmatpush1.msra.mxu0 0.0
    %1425 = vmatprep.subr.mxu0 0.0
    %1426 = vmatpush1.msra.mxu0 0.0
    %1427 = vmatprep.subr.mxu0 0.0
    %1428 = vmatpush1.msra.mxu0 0.0
    %1429 = vmatprep.subr.mxu0 0.0
    %1430 = vmatpush1.msra.mxu0 0.0
    %1431 = vmatprep.subr.mxu0 0.0
    %1432 = vmatpush1.msra.mxu0 0.0
    %1433 = vmatprep.subr.mxu0 0.0
    %1434 = vmatpush1.msra.mxu0 0.0
    %1435 = vmatprep.subr.mxu0 0.0
    %1436 = vmatpush1.msra.mxu0 0.0
    %1437 = vmatprep.subr.mxu0 0.0
    %1438 = vmatpush1.msra.mxu0 0.0
    %1439 = vmatprep.subr.mxu0 0.0
    %1440 = vmatpush1.msra.mxu0 0.0
    %1441 = vmatprep.subr.mxu0 0.0
    %1442 = vmatpush1.msra.mxu0 0.0
    %1443 = vmatprep.subr.mxu0 0.0
    %1444 = vmatpush1.msra.mxu0 0.0
    %1445 = vmatprep.subr.mxu0 0.0
    %1446 = vmatpush1.msra.mxu0 0.0
    %1447 = vmatprep.subr.mxu0 0.0
    %1448 = vmatpush1.msra.mxu0 0.0
    %1449 = vmatprep.subr.mxu0 0.0
    %1450 = vmatpush1.msra.mxu0 0.0
    %1451 = vmatprep.subr.mxu0 0.0
    %1452 = vmatpush1.msra.mxu0 0.0
    %1453 = vmatprep.subr.mxu0 0.0
    %1454 = vmatpush1.msra.mxu0 0.0
    %1455 = vmatprep.subr.mxu0 0.0
    %1456 = vmatpush1.msra.mxu0 0.0
    %1457 = vmatprep.subr.mxu0 0.0
    %1458 = vmatpush1.msra.mxu0 0.0
    %1459 = vmatprep.subr.mxu0 0.0
    %1460 = vmatpush1.msra.mxu0 0.0
    %1461 = vmatprep.mubr.f32.mxu0 0.0
    %1462 = vmatmul.mubr.f32.gmra.mrb[0].mxu0 %v1374
    %v1463 = vpop.f32.mrb[0].mxu0
    %v1464 = vadd.f32 %v1365, %v1463
    %v1465 = vpop.f32.mrb[0].mxu0
    %1466 = vmatprep.mubr.f32.mxu0 0.0
    %1467 = vmatmul.mubr.f32.gmra.mrb[0].mxu0 %v1377
    %v1468 = vpop.f32.mrb[0].mxu0
    %v1469 = vadd.f32 %v1366, %v1468
    %v1470 = vpop.f32.mrb[0].mxu0
    %1471 = vmatprep.mubr.f32.mxu0 0.0
    %1472 = vmatmul.mubr.f32.gmra.mrb[0].mxu0 %v1380
    %v1473 = vpop.f32.mrb[0].mxu0
    %v1474 = vadd.f32 %v1367, %v1473
    %v1475 = vpop.f32.mrb[0].mxu0
    %1476 = vmatprep.mubr.f32.mxu0 0.0
    %1477 = vmatmul.mubr.f32.gmra.mrb[0].mxu0 %v1383
    %v1478 = vpop.f32.mrb[0].mxu0
    %v1479 = vadd.f32 %v1368, %v1478
    %v1480 = vpop.f32.mrb[0].mxu0
    %1481 = vmatprep.mubr.f32.mxu0 0.0
    %1482 = vmatmul.mubr.f32.gmra.mrb[0].mxu0 %v1386
    %v1483 = vpop.f32.mrb[0].mxu0
    %v1484 = vadd.f32 %v1369, %v1483
    %v1485 = vpop.f32.mrb[0].mxu0
    %1486 = vmatprep.mubr.f32.mxu0 0.0
    %1487 = vmatmul.mubr.f32.gmra.mrb[0].mxu0 %v1389
    %v1488 = vpop.f32.mrb[0].mxu0
    %v1489 = vadd.f32 %v1370, %v1488
    %v1490 = vpop.f32.mrb[0].mxu0
    %1491 = vmatprep.mubr.f32.mxu0 0.0
    %1492 = vmatmul.mubr.f32.gmra.mrb[0].mxu0 %v1392
    %v1493 = vpop.f32.mrb[0].mxu0
    %v1494 = vadd.f32 %v1371, %v1493
    %v1495 = vpop.f32.mrb[0].mxu0
    %1496 = vmatprep.mubr.f32.mxu0 0.0
    %1497 = vmatmul.mubr.f32.gmra.mrb[0].mxu0 %v1395
    %v1498 = vpop.f32.mrb[0].mxu0
    %v1499 = vadd.f32 %v1372, %v1498
    %v1500 = vpop.f32.mrb[0].mxu0
    %1501 = vdwg.mxu0
    %v1502 = vmul.f32 %v292, %v1464
    %v1503 = vmul.f32 %v293, %v1469
    %v1504 = vmul.f32 %v294, %v1474
    %v1505 = vmul.f32 %v295, %v1479
    %v1506 = vmul.f32 %v296, %v1484
    %v1507 = vmul.f32 %v297, %v1489
    %v1508 = vmul.f32 %v298, %v1494
    %v1509 = vmul.f32 %v299, %v1499
    %1510 = vxpose.xlu0.b32.start [1/16] %v58, 128
    %1511 = vxpose.xlu0.b32.cont [2/16] %v59, 128
    %1512 = vxpose.xlu0.b32.cont [3/16] %v60, 128
    %1513 = vxpose.xlu0.b32.cont [4/16] %v61, 128
    %1514 = vxpose.xlu0.b32.cont [5/16] %v62, 128
    %1515 = vxpose.xlu0.b32.cont [6/16] %v63, 128
    %1516 = vxpose.xlu0.b32.cont [7/16] %v64, 128
    %1517 = vxpose.xlu0.b32.cont [8/16] %v65, 128
    %1518 = vxpose.xlu0.b32.cont [9/16] 0.0, 128
    %1519 = vxpose.xlu0.b32.cont [10/16] 0.0, 128
    %1520 = vxpose.xlu0.b32.cont [11/16] 0.0, 128
    %1521 = vxpose.xlu0.b32.cont [12/16] 0.0, 128
    %1522 = vxpose.xlu0.b32.cont [13/16] 0.0, 128
    %1523 = vxpose.xlu0.b32.cont [14/16] 0.0, 128
    %1524 = vxpose.xlu0.b32.cont [15/16] 0.0, 128
    %1525 = vxpose.xlu0.b32.end [16/16] 0.0, 128
    %v1526 = vpop.trf.xlu0
    %v1527 = vpop.trf.xlu0
    %v1528 = vpop.trf.xlu0
    %v1529 = vpop.trf.xlu0
    %v1530 = vpop.trf.xlu0
    %v1531 = vpop.trf.xlu0
    %v1532 = vpop.trf.xlu0
    %v1533 = vpop.trf.xlu0
    %v1534 = vpop.trf.xlu0
    %v1535 = vpop.trf.xlu0
    %v1536 = vpop.trf.xlu0
    %v1537 = vpop.trf.xlu0
    %v1538 = vpop.trf.xlu0
    %v1539 = vpop.trf.xlu0
    %v1540 = vpop.trf.xlu0
    %v1541 = vpop.trf.xlu0
    %v1543 = vsel %vm82, %v1526, 0
    %v1546 = vsel %vm82, %v1527, 0
    %v1549 = vsel %vm82, %v1528, 0
    %v1552 = vsel %vm82, %v1529, 0
    %v1555 = vsel %vm82, %v1530, 0
    %v1558 = vsel %vm82, %v1531, 0
    %v1561 = vsel %vm82, %v1532, 0
    %v1564 = vsel %vm82, %v1533, 0
    %1566 = vmatprep.subr.mxu0 0.0
    %1567 = vmatpush1.msra.mxu0 %v1502
    %1568 = vmatprep.subr.mxu0 0.0
    %1569 = vmatpush1.msra.mxu0 %v1503
    %1570 = vmatprep.subr.mxu0 0.0
    %1571 = vmatpush1.msra.mxu0 %v1504
    %1572 = vmatprep.subr.mxu0 0.0
    %1573 = vmatpush1.msra.mxu0 %v1505
    %1574 = vmatprep.subr.mxu0 0.0
    %1575 = vmatpush1.msra.mxu0 %v1506
    %1576 = vmatprep.subr.mxu0 0.0
    %1577 = vmatpush1.msra.mxu0 %v1507
    %1578 = vmatprep.subr.mxu0 0.0
    %1579 = vmatpush1.msra.mxu0 %v1508
    %1580 = vmatprep.subr.mxu0 0.0
    %1581 = vmatpush1.msra.mxu0 %v1509
    %1582 = vmatprep.subr.mxu0 0.0
    %1583 = vmatpush1.msra.mxu0 0.0
    %1584 = vmatprep.subr.mxu0 0.0
    %1585 = vmatpush1.msra.mxu0 0.0
    %1586 = vmatprep.subr.mxu0 0.0
    %1587 = vmatpush1.msra.mxu0 0.0
    %1588 = vmatprep.subr.mxu0 0.0
    %1589 = vmatpush1.msra.mxu0 0.0
    %1590 = vmatprep.subr.mxu0 0.0
    %1591 = vmatpush1.msra.mxu0 0.0
    %1592 = vmatprep.subr.mxu0 0.0
    %1593 = vmatpush1.msra.mxu0 0.0
    %1594 = vmatprep.subr.mxu0 0.0
    %1595 = vmatpush1.msra.mxu0 0.0
    %1596 = vmatprep.subr.mxu0 0.0
    %1597 = vmatpush1.msra.mxu0 0.0
    %1598 = vmatprep.subr.mxu0 0.0
    %1599 = vmatpush1.msra.mxu0 0.0
    %1600 = vmatprep.subr.mxu0 0.0
    %1601 = vmatpush1.msra.mxu0 0.0
    %1602 = vmatprep.subr.mxu0 0.0
    %1603 = vmatpush1.msra.mxu0 0.0
    %1604 = vmatprep.subr.mxu0 0.0
    %1605 = vmatpush1.msra.mxu0 0.0
    %1606 = vmatprep.subr.mxu0 0.0
    %1607 = vmatpush1.msra.mxu0 0.0
    %1608 = vmatprep.subr.mxu0 0.0
    %1609 = vmatpush1.msra.mxu0 0.0
    %1610 = vmatprep.subr.mxu0 0.0
    %1611 = vmatpush1.msra.mxu0 0.0
    %1612 = vmatprep.subr.mxu0 0.0
    %1613 = vmatpush1.msra.mxu0 0.0
    %1614 = vmatprep.subr.mxu0 0.0
    %1615 = vmatpush1.msra.mxu0 0.0
    %1616 = vmatprep.subr.mxu0 0.0
    %1617 = vmatpush1.msra.mxu0 0.0
    %1618 = vmatprep.subr.mxu0 0.0
    %1619 = vmatpush1.msra.mxu0 0.0
    %1620 = vmatprep.subr.mxu0 0.0
    %1621 = vmatpush1.msra.mxu0 0.0
    %1622 = vmatprep.subr.mxu0 0.0
    %1623 = vmatpush1.msra.mxu0 0.0
    %1624 = vmatprep.subr.mxu0 0.0
    %1625 = vmatpush1.msra.mxu0 0.0
    %1626 = vmatprep.subr.mxu0 0.0
    %1627 = vmatpush1.msra.mxu0 0.0
    %1628 = vmatprep.subr.mxu0 0.0
    %1629 = vmatpush1.msra.mxu0 0.0
    %1630 = vmatprep.mubr.f32.mxu0 0.0
    %1631 = vmatmul.mubr.f32.gmra.mrb[0].mxu0 %v1543
    %v1632 = vpop.f32.mrb[0].mxu0
    %v1633 = vadd.f32 0.0, %v1632
    %v1634 = vpop.f32.mrb[0].mxu0
    %1635 = vmatprep.mubr.f32.mxu0 0.0
    %1636 = vmatmul.mubr.f32.gmra.mrb[0].mxu0 %v1546
    %v1637 = vpop.f32.mrb[0].mxu0
    %v1638 = vadd.f32 0.0, %v1637
    %v1639 = vpop.f32.mrb[0].mxu0
    %1640 = vmatprep.mubr.f32.mxu0 0.0
    %1641 = vmatmul.mubr.f32.gmra.mrb[0].mxu0 %v1549
    %v1642 = vpop.f32.mrb[0].mxu0
    %v1643 = vadd.f32 0.0, %v1642
    %v1644 = vpop.f32.mrb[0].mxu0
    %1645 = vmatprep.mubr.f32.mxu0 0.0
    %1646 = vmatmul.mubr.f32.gmra.mrb[0].mxu0 %v1552
    %v1647 = vpop.f32.mrb[0].mxu0
    %v1648 = vadd.f32 0.0, %v1647
    %v1649 = vpop.f32.mrb[0].mxu0
    %1650 = vmatprep.mubr.f32.mxu0 0.0
    %1651 = vmatmul.mubr.f32.gmra.mrb[0].mxu0 %v1555
    %v1652 = vpop.f32.mrb[0].mxu0
    %v1653 = vadd.f32 0.0, %v1652
    %v1654 = vpop.f32.mrb[0].mxu0
    %1655 = vmatprep.mubr.f32.mxu0 0.0
    %1656 = vmatmul.mubr.f32.gmra.mrb[0].mxu0 %v1558
    %v1657 = vpop.f32.mrb[0].mxu0
    %v1658 = vadd.f32 0.0, %v1657
    %v1659 = vpop.f32.mrb[0].mxu0
    %1660 = vmatprep.mubr.f32.mxu0 0.0
    %1661 = vmatmul.mubr.f32.gmra.mrb[0].mxu0 %v1561
    %v1662 = vpop.f32.mrb[0].mxu0
    %v1663 = vadd.f32 0.0, %v1662
    %v1664 = vpop.f32.mrb[0].mxu0
    %1665 = vmatprep.mubr.f32.mxu0 0.0
    %1666 = vmatmul.mubr.f32.gmra.mrb[0].mxu0 %v1564
    %v1667 = vpop.f32.mrb[0].mxu0
    %v1668 = vadd.f32 0.0, %v1667
    %v1669 = vpop.f32.mrb[0].mxu0
    %1670 = vdwg.mxu0
    %1672 = vset.pattern.permute.xlu0 0
    %1673 = vperm.xlu0 %1672, %v333
    %v1674 = vpop.permute.xlu0 %1673
    %1677 = vset.pattern.permute.xlu0 0
    %1678 = vperm.xlu0 %1677, %v335
    %v1679 = vpop.permute.xlu0 %1678
    %1682 = vset.pattern.permute.xlu0 0
    %1683 = vperm.xlu0 %1682, %v337
    %v1684 = vpop.permute.xlu0 %1683
    %1687 = vset.pattern.permute.xlu0 0
    %1688 = vperm.xlu0 %1687, %v339
    %v1689 = vpop.permute.xlu0 %1688
    %1692 = vset.pattern.permute.xlu0 0
    %1693 = vperm.xlu0 %1692, %v341
    %v1694 = vpop.permute.xlu0 %1693
    %1697 = vset.pattern.permute.xlu0 0
    %1698 = vperm.xlu0 %1697, %v343
    %v1699 = vpop.permute.xlu0 %1698
    %1702 = vset.pattern.permute.xlu0 0
    %1703 = vperm.xlu0 %1702, %v345
    %v1704 = vpop.permute.xlu0 %1703
    %1707 = vset.pattern.permute.xlu0 0
    %1708 = vperm.xlu0 %1707, %v347
    %v1709 = vpop.permute.xlu0 %1708
    %v1711 = vmul.f32 %v1633, %v1674
    %v1712 = vmul.f32 %v1638, %v1679
    %v1713 = vmul.f32 %v1643, %v1684
    %v1714 = vmul.f32 %v1648, %v1689
    %v1715 = vmul.f32 %v1653, %v1694
    %v1716 = vmul.f32 %v1658, %v1699
    %v1717 = vmul.f32 %v1663, %v1704
    %v1718 = vmul.f32 %v1668, %v1709
    %vm1719 = vcmp.ge.f32.partialorder %v1711, 0.0
    %vm1720 = vcmp.ge.f32.partialorder %v1712, 0.0
    %vm1721 = vcmp.ge.f32.partialorder %v1713, 0.0
    %vm1722 = vcmp.ge.f32.partialorder %v1714, 0.0
    %vm1723 = vcmp.ge.f32.partialorder %v1715, 0.0
    %vm1724 = vcmp.ge.f32.partialorder %v1716, 0.0
    %vm1725 = vcmp.ge.f32.partialorder %v1717, 0.0
    %vm1726 = vcmp.ge.f32.partialorder %v1718, 0.0
    %v1727 = vmul.f32 %v1711, 0.01
    %v1728 = vmul.f32 %v1712, 0.01
    %v1729 = vmul.f32 %v1713, 0.01
    %v1730 = vmul.f32 %v1714, 0.01
    %v1731 = vmul.f32 %v1715, 0.01
    %v1732 = vmul.f32 %v1716, 0.01
    %v1733 = vmul.f32 %v1717, 0.01
    %v1734 = vmul.f32 %v1718, 0.01
    %v1735 = vsel %vm1719, %v1711, %v1727
    %v1736 = vsel %vm1720, %v1712, %v1728
    %v1737 = vsel %vm1721, %v1713, %v1729
    %v1738 = vsel %vm1722, %v1714, %v1730
    %v1739 = vsel %vm1723, %v1715, %v1731
    %v1740 = vsel %vm1724, %v1716, %v1732
    %v1741 = vsel %vm1725, %v1717, %v1733
    %v1742 = vsel %vm1726, %v1718, %v1734
    %v1743 = vld [vmem:[%s9] sm:$0xff]
    %v1744 = vld [vmem:[%s9 + $0x8] sm:$0xff]
    %v1745 = vld [vmem:[%s9 + $0x10] sm:$0xff]
    %v1746 = vld [vmem:[%s9 + $0x18] sm:$0xff]
    %v1747 = vld [vmem:[%s10] sm:$0x1]
    %v1749 = vlaneseq
    %v1750 = vshrl.u32 %v1749, 7
    %v1751 = vsub.s32 0, %v1750
    %v1752 = vrot.slane %v1747, %v1751
    %v1755 = vsel %vm367, %v1735, 0
    %v1758 = vsel %vm367, %v1736, 0
    %v1761 = vsel %vm367, %v1737, 0
    %v1764 = vsel %vm367, %v1738, 0
    %v1767 = vsel %vm367, %v1739, 0
    %v1770 = vsel %vm367, %v1740, 0
    %v1773 = vsel %vm367, %v1741, 0
    %v1776 = vsel %vm367, %v1742, 0
    %1778 = vmatprep.subr.mxu0 0.0
    %1779 = vmatpush1.msra.mxu0 %v1743
    %1780 = vmatprep.subr.mxu0 0.0
    %1781 = vmatpush1.msra.mxu0 %v1744
    %1782 = vmatprep.subr.mxu0 0.0
    %1783 = vmatpush1.msra.mxu0 %v1745
    %1784 = vmatprep.subr.mxu0 0.0
    %1785 = vmatpush1.msra.mxu0 %v1746
    %1786 = vmatprep.subr.mxu0 0.0
    %1787 = vmatpush1.msra.mxu0 0.0
    %1788 = vmatprep.subr.mxu0 0.0
    %1789 = vmatpush1.msra.mxu0 0.0
    %1790 = vmatprep.subr.mxu0 0.0
    %1791 = vmatpush1.msra.mxu0 0.0
    %1792 = vmatprep.subr.mxu0 0.0
    %1793 = vmatpush1.msra.mxu0 0.0
    %1794 = vmatprep.subr.mxu0 0.0
    %1795 = vmatpush1.msra.mxu0 0.0
    %1796 = vmatprep.subr.mxu0 0.0
    %1797 = vmatpush1.msra.mxu0 0.0
    %1798 = vmatprep.subr.mxu0 0.0
    %1799 = vmatpush1.msra.mxu0 0.0
    %1800 = vmatprep.subr.mxu0 0.0
    %1801 = vmatpush1.msra.mxu0 0.0
    %1802 = vmatprep.subr.mxu0 0.0
    %1803 = vmatpush1.msra.mxu0 0.0
    %1804 = vmatprep.subr.mxu0 0.0
    %1805 = vmatpush1.msra.mxu0 0.0
    %1806 = vmatprep.subr.mxu0 0.0
    %1807 = vmatpush1.msra.mxu0 0.0
    %1808 = vmatprep.subr.mxu0 0.0
    %1809 = vmatpush1.msra.mxu0 0.0
    %1810 = vmatprep.subr.mxu0 0.0
    %1811 = vmatpush1.msra.mxu0 0.0
    %1812 = vmatprep.subr.mxu0 0.0
    %1813 = vmatpush1.msra.mxu0 0.0
    %1814 = vmatprep.subr.mxu0 0.0
    %1815 = vmatpush1.msra.mxu0 0.0
    %1816 = vmatprep.subr.mxu0 0.0
    %1817 = vmatpush1.msra.mxu0 0.0
    %1818 = vmatprep.subr.mxu0 0.0
    %1819 = vmatpush1.msra.mxu0 0.0
    %1820 = vmatprep.subr.mxu0 0.0
    %1821 = vmatpush1.msra.mxu0 0.0
    %1822 = vmatprep.subr.mxu0 0.0
    %1823 = vmatpush1.msra.mxu0 0.0
    %1824 = vmatprep.subr.mxu0 0.0
    %1825 = vmatpush1.msra.mxu0 0.0
    %1826 = vmatprep.subr.mxu0 0.0
    %1827 = vmatpush1.msra.mxu0 0.0
    %1828 = vmatprep.subr.mxu0 0.0
    %1829 = vmatpush1.msra.mxu0 0.0
    %1830 = vmatprep.subr.mxu0 0.0
    %1831 = vmatpush1.msra.mxu0 0.0
    %1832 = vmatprep.subr.mxu0 0.0
    %1833 = vmatpush1.msra.mxu0 0.0
    %1834 = vmatprep.subr.mxu0 0.0
    %1835 = vmatpush1.msra.mxu0 0.0
    %1836 = vmatprep.subr.mxu0 0.0
    %1837 = vmatpush1.msra.mxu0 0.0
    %1838 = vmatprep.subr.mxu0 0.0
    %1839 = vmatpush1.msra.mxu0 0.0
    %1840 = vmatprep.subr.mxu0 0.0
    %1841 = vmatpush1.msra.mxu0 0.0
    %1842 = vmatprep.mubr.f32.mxu0 0.0
    %1843 = vmatmul.mubr.f32.gmra.mrb[0].mxu0 %v1755
    %v1844 = vpop.f32.mrb[0].mxu0
    %v1845 = vadd.f32 %v1752, %v1844
    %v1846 = vpop.f32.mrb[0].mxu0
    %1847 = vmatprep.mubr.f32.mxu0 0.0
    %1848 = vmatmul.mubr.f32.gmra.mrb[0].mxu0 %v1758
    %v1849 = vpop.f32.mrb[0].mxu0
    %v1850 = vadd.f32 %v1752, %v1849
    %v1851 = vpop.f32.mrb[0].mxu0
    %1852 = vmatprep.mubr.f32.mxu0 0.0
    %1853 = vmatmul.mubr.f32.gmra.mrb[0].mxu0 %v1761
    %v1854 = vpop.f32.mrb[0].mxu0
    %v1855 = vadd.f32 %v1752, %v1854
    %v1856 = vpop.f32.mrb[0].mxu0
    %1857 = vmatprep.mubr.f32.mxu0 0.0
    %1858 = vmatmul.mubr.f32.gmra.mrb[0].mxu0 %v1764
    %v1859 = vpop.f32.mrb[0].mxu0
    %v1860 = vadd.f32 %v1752, %v1859
    %v1861 = vpop.f32.mrb[0].mxu0
    %1862 = vmatprep.mubr.f32.mxu0 0.0
    %1863 = vmatmul.mubr.f32.gmra.mrb[0].mxu0 %v1767
    %v1864 = vpop.f32.mrb[0].mxu0
    %v1865 = vadd.f32 %v1752, %v1864
    %v1866 = vpop.f32.mrb[0].mxu0
    %1867 = vmatprep.mubr.f32.mxu0 0.0
    %1868 = vmatmul.mubr.f32.gmra.mrb[0].mxu0 %v1770
    %v1869 = vpop.f32.mrb[0].mxu0
    %v1870 = vadd.f32 %v1752, %v1869
    %v1871 = vpop.f32.mrb[0].mxu0
    %1872 = vmatprep.mubr.f32.mxu0 0.0
    %1873 = vmatmul.mubr.f32.gmra.mrb[0].mxu0 %v1773
    %v1874 = vpop.f32.mrb[0].mxu0
    %v1875 = vadd.f32 %v1752, %v1874
    %v1876 = vpop.f32.mrb[0].mxu0
    %1877 = vmatprep.mubr.f32.mxu0 0.0
    %1878 = vmatmul.mubr.f32.gmra.mrb[0].mxu0 %v1776
    %v1879 = vpop.f32.mrb[0].mxu0
    %v1880 = vadd.f32 %v1752, %v1879
    %v1881 = vpop.f32.mrb[0].mxu0
    %1882 = vdwg.mxu0
    %v1883 = vmul.f32 %v292, %v1845
    %v1884 = vmul.f32 %v293, %v1850
    %v1885 = vmul.f32 %v294, %v1855
    %v1886 = vmul.f32 %v295, %v1860
    %v1887 = vmul.f32 %v296, %v1865
    %v1888 = vmul.f32 %v297, %v1870
    %v1889 = vmul.f32 %v298, %v1875
    %v1890 = vmul.f32 %v299, %v1880
    %1891 = vmatprep.subr.mxu0 0.0
    %1892 = vmatpush1.msra.mxu0 %v1883
    %1893 = vmatprep.subr.mxu0 0.0
    %1894 = vmatpush1.msra.mxu0 %v1884
    %1895 = vmatprep.subr.mxu0 0.0
    %1896 = vmatpush1.msra.mxu0 %v1885
    %1897 = vmatprep.subr.mxu0 0.0
    %1898 = vmatpush1.msra.mxu0 %v1886
    %1899 = vmatprep.subr.mxu0 0.0
    %1900 = vmatpush1.msra.mxu0 %v1887
    %1901 = vmatprep.subr.mxu0 0.0
    %1902 = vmatpush1.msra.mxu0 %v1888
    %1903 = vmatprep.subr.mxu0 0.0
    %1904 = vmatpush1.msra.mxu0 %v1889
    %1905 = vmatprep.subr.mxu0 0.0
    %1906 = vmatpush1.msra.mxu0 %v1890
    %1907 = vmatprep.subr.mxu0 0.0
    %1908 = vmatpush1.msra.mxu0 0.0
    %1909 = vmatprep.subr.mxu0 0.0
    %1910 = vmatpush1.msra.mxu0 0.0
    %1911 = vmatprep.subr.mxu0 0.0
    %1912 = vmatpush1.msra.mxu0 0.0
    %1913 = vmatprep.subr.mxu0 0.0
    %1914 = vmatpush1.msra.mxu0 0.0
    %1915 = vmatprep.subr.mxu0 0.0
    %1916 = vmatpush1.msra.mxu0 0.0
    %1917 = vmatprep.subr.mxu0 0.0
    %1918 = vmatpush1.msra.mxu0 0.0
    %1919 = vmatprep.subr.mxu0 0.0
    %1920 = vmatpush1.msra.mxu0 0.0
    %1921 = vmatprep.subr.mxu0 0.0
    %1922 = vmatpush1.msra.mxu0 0.0
    %1923 = vmatprep.subr.mxu0 0.0
    %1924 = vmatpush1.msra.mxu0 0.0
    %1925 = vmatprep.subr.mxu0 0.0
    %1926 = vmatpush1.msra.mxu0 0.0
    %1927 = vmatprep.subr.mxu0 0.0
    %1928 = vmatpush1.msra.mxu0 0.0
    %1929 = vmatprep.subr.mxu0 0.0
    %1930 = vmatpush1.msra.mxu0 0.0
    %1931 = vmatprep.subr.mxu0 0.0
    %1932 = vmatpush1.msra.mxu0 0.0
    %1933 = vmatprep.subr.mxu0 0.0
    %1934 = vmatpush1.msra.mxu0 0.0
    %1935 = vmatprep.subr.mxu0 0.0
    %1936 = vmatpush1.msra.mxu0 0.0
    %1937 = vmatprep.subr.mxu0 0.0
    %1938 = vmatpush1.msra.mxu0 0.0
    %1939 = vmatprep.subr.mxu0 0.0
    %1940 = vmatpush1.msra.mxu0 0.0
    %1941 = vmatprep.subr.mxu0 0.0
    %1942 = vmatpush1.msra.mxu0 0.0
    %1943 = vmatprep.subr.mxu0 0.0
    %1944 = vmatpush1.msra.mxu0 0.0
    %1945 = vmatprep.subr.mxu0 0.0
    %1946 = vmatpush1.msra.mxu0 0.0
    %1947 = vmatprep.subr.mxu0 0.0
    %1948 = vmatpush1.msra.mxu0 0.0
    %1949 = vmatprep.subr.mxu0 0.0
    %1950 = vmatpush1.msra.mxu0 0.0
    %1951 = vmatprep.subr.mxu0 0.0
    %1952 = vmatpush1.msra.mxu0 0.0
    %1953 = vmatprep.subr.mxu0 0.0
    %1954 = vmatpush1.msra.mxu0 0.0
    %1955 = vmatprep.mubr.f32.mxu0 0.0
    %1956 = vmatmul.mubr.f32.gmra.mrb[0].mxu0 %v1374
    %v1957 = vpop.f32.mrb[0].mxu0
    %v1958 = vadd.f32 %v1883, %v1957
    %v1959 = vpop.f32.mrb[0].mxu0
    %1960 = vmatprep.mubr.f32.mxu0 0.0
    %1961 = vmatmul.mubr.f32.gmra.mrb[0].mxu0 %v1377
    %v1962 = vpop.f32.mrb[0].mxu0
    %v1963 = vadd.f32 %v1884, %v1962
    %v1964 = vpop.f32.mrb[0].mxu0
    %1965 = vmatprep.mubr.f32.mxu0 0.0
    %1966 = vmatmul.mubr.f32.gmra.mrb[0].mxu0 %v1380
    %v1967 = vpop.f32.mrb[0].mxu0
    %v1968 = vadd.f32 %v1885, %v1967
    %v1969 = vpop.f32.mrb[0].mxu0
    %1970 = vmatprep.mubr.f32.mxu0 0.0
    %1971 = vmatmul.mubr.f32.gmra.mrb[0].mxu0 %v1383
    %v1972 = vpop.f32.mrb[0].mxu0
    %v1973 = vadd.f32 %v1886, %v1972
    %v1974 = vpop.f32.mrb[0].mxu0
    %1975 = vmatprep.mubr.f32.mxu0 0.0
    %1976 = vmatmul.mubr.f32.gmra.mrb[0].mxu0 %v1386
    %v1977 = vpop.f32.mrb[0].mxu0
    %v1978 = vadd.f32 %v1887, %v1977
    %v1979 = vpop.f32.mrb[0].mxu0
    %1980 = vmatprep.mubr.f32.mxu0 0.0
    %1981 = vmatmul.mubr.f32.gmra.mrb[0].mxu0 %v1389
    %v1982 = vpop.f32.mrb[0].mxu0
    %v1983 = vadd.f32 %v1888, %v1982
    %v1984 = vpop.f32.mrb[0].mxu0
    %1985 = vmatprep.mubr.f32.mxu0 0.0
    %1986 = vmatmul.mubr.f32.gmra.mrb[0].mxu0 %v1392
    %v1987 = vpop.f32.mrb[0].mxu0
    %v1988 = vadd.f32 %v1889, %v1987
    %v1989 = vpop.f32.mrb[0].mxu0
    %1990 = vmatprep.mubr.f32.mxu0 0.0
    %1991 = vmatmul.mubr.f32.gmra.mrb[0].mxu0 %v1395
    %v1992 = vpop.f32.mrb[0].mxu0
    %v1993 = vadd.f32 %v1890, %v1992
    %v1994 = vpop.f32.mrb[0].mxu0
    %1995 = vdwg.mxu0
    %v1996 = vmul.f32 %v292, %v1958
    %v1997 = vmul.f32 %v293, %v1963
    %v1998 = vmul.f32 %v294, %v1968
    %v1999 = vmul.f32 %v295, %v1973
    %v2000 = vmul.f32 %v296, %v1978
    %v2001 = vmul.f32 %v297, %v1983
    %v2002 = vmul.f32 %v298, %v1988
    %v2003 = vmul.f32 %v299, %v1993
    %2004 = vmatprep.subr.mxu0 0.0
    %2005 = vmatpush1.msra.mxu0 %v1996
    %2006 = vmatprep.subr.mxu0 0.0
    %2007 = vmatpush1.msra.mxu0 %v1997
    %2008 = vmatprep.subr.mxu0 0.0
    %2009 = vmatpush1.msra.mxu0 %v1998
    %2010 = vmatprep.subr.mxu0 0.0
    %2011 = vmatpush1.msra.mxu0 %v1999
    %2012 = vmatprep.subr.mxu0 0.0
    %2013 = vmatpush1.msra.mxu0 %v2000
    %2014 = vmatprep.subr.mxu0 0.0
    %2015 = vmatpush1.msra.mxu0 %v2001
    %2016 = vmatprep.subr.mxu0 0.0
    %2017 = vmatpush1.msra.mxu0 %v2002
    %2018 = vmatprep.subr.mxu0 0.0
    %2019 = vmatpush1.msra.mxu0 %v2003
    %2020 = vmatprep.subr.mxu0 0.0
    %2021 = vmatpush1.msra.mxu0 0.0
    %2022 = vmatprep.subr.mxu0 0.0
    %2023 = vmatpush1.msra.mxu0 0.0
    %2024 = vmatprep.subr.mxu0 0.0
    %2025 = vmatpush1.msra.mxu0 0.0
    %2026 = vmatprep.subr.mxu0 0.0
    %2027 = vmatpush1.msra.mxu0 0.0
    %2028 = vmatprep.subr.mxu0 0.0
    %2029 = vmatpush1.msra.mxu0 0.0
    %2030 = vmatprep.subr.mxu0 0.0
    %2031 = vmatpush1.msra.mxu0 0.0
    %2032 = vmatprep.subr.mxu0 0.0
    %2033 = vmatpush1.msra.mxu0 0.0
    %2034 = vmatprep.subr.mxu0 0.0
    %2035 = vmatpush1.msra.mxu0 0.0
    %2036 = vmatprep.subr.mxu0 0.0
    %2037 = vmatpush1.msra.mxu0 0.0
    %2038 = vmatprep.subr.mxu0 0.0
    %2039 = vmatpush1.msra.mxu0 0.0
    %2040 = vmatprep.subr.mxu0 0.0
    %2041 = vmatpush1.msra.mxu0 0.0
    %2042 = vmatprep.subr.mxu0 0.0
    %2043 = vmatpush1.msra.mxu0 0.0
    %2044 = vmatprep.subr.mxu0 0.0
    %2045 = vmatpush1.msra.mxu0 0.0
    %2046 = vmatprep.subr.mxu0 0.0
    %2047 = vmatpush1.msra.mxu0 0.0
    %2048 = vmatprep.subr.mxu0 0.0
    %2049 = vmatpush1.msra.mxu0 0.0
    %2050 = vmatprep.subr.mxu0 0.0
    %2051 = vmatpush1.msra.mxu0 0.0
    %2052 = vmatprep.subr.mxu0 0.0
    %2053 = vmatpush1.msra.mxu0 0.0
    %2054 = vmatprep.subr.mxu0 0.0
    %2055 = vmatpush1.msra.mxu0 0.0
    %2056 = vmatprep.subr.mxu0 0.0
    %2057 = vmatpush1.msra.mxu0 0.0
    %2058 = vmatprep.subr.mxu0 0.0
    %2059 = vmatpush1.msra.mxu0 0.0
    %2060 = vmatprep.subr.mxu0 0.0
    %2061 = vmatpush1.msra.mxu0 0.0
    %2062 = vmatprep.subr.mxu0 0.0
    %2063 = vmatpush1.msra.mxu0 0.0
    %2064 = vmatprep.subr.mxu0 0.0
    %2065 = vmatpush1.msra.mxu0 0.0
    %2066 = vmatprep.subr.mxu0 0.0
    %2067 = vmatpush1.msra.mxu0 0.0
    %2068 = vmatprep.mubr.f32.mxu0 0.0
    %2069 = vmatmul.mubr.f32.gmra.mrb[0].mxu0 %v1543
    %v2070 = vpop.f32.mrb[0].mxu0
    %v2071 = vadd.f32 0.0, %v2070
    %v2072 = vpop.f32.mrb[0].mxu0
    %2073 = vmatprep.mubr.f32.mxu0 0.0
    %2074 = vmatmul.mubr.f32.gmra.mrb[0].mxu0 %v1546
    %v2075 = vpop.f32.mrb[0].mxu0
    %v2076 = vadd.f32 0.0, %v2075
    %v2077 = vpop.f32.mrb[0].mxu0
    %2078 = vmatprep.mubr.f32.mxu0 0.0
    %2079 = vmatmul.mubr.f32.gmra.mrb[0].mxu0 %v1549
    %v2080 = vpop.f32.mrb[0].mxu0
    %v2081 = vadd.f32 0.0, %v2080
    %v2082 = vpop.f32.mrb[0].mxu0
    %2083 = vmatprep.mubr.f32.mxu0 0.0
    %2084 = vmatmul.mubr.f32.gmra.mrb[0].mxu0 %v1552
    %v2085 = vpop.f32.mrb[0].mxu0
    %v2086 = vadd.f32 0.0, %v2085
    %v2087 = vpop.f32.mrb[0].mxu0
    %2088 = vmatprep.mubr.f32.mxu0 0.0
    %2089 = vmatmul.mubr.f32.gmra.mrb[0].mxu0 %v1555
    %v2090 = vpop.f32.mrb[0].mxu0
    %v2091 = vadd.f32 0.0, %v2090
    %v2092 = vpop.f32.mrb[0].mxu0
    %2093 = vmatprep.mubr.f32.mxu0 0.0
    %2094 = vmatmul.mubr.f32.gmra.mrb[0].mxu0 %v1558
    %v2095 = vpop.f32.mrb[0].mxu0
    %v2096 = vadd.f32 0.0, %v2095
    %v2097 = vpop.f32.mrb[0].mxu0
    %2098 = vmatprep.mubr.f32.mxu0 0.0
    %2099 = vmatmul.mubr.f32.gmra.mrb[0].mxu0 %v1561
    %v2100 = vpop.f32.mrb[0].mxu0
    %v2101 = vadd.f32 0.0, %v2100
    %v2102 = vpop.f32.mrb[0].mxu0
    %2103 = vmatprep.mubr.f32.mxu0 0.0
    %2104 = vmatmul.mubr.f32.gmra.mrb[0].mxu0 %v1564
    %v2105 = vpop.f32.mrb[0].mxu0
    %v2106 = vadd.f32 0.0, %v2105
    %v2107 = vpop.f32.mrb[0].mxu0
    %2108 = vdwg.mxu0
    %v2109 = vmul.f32 %v2071, %v1674
    %v2110 = vmul.f32 %v2076, %v1679
    %v2111 = vmul.f32 %v2081, %v1684
    %v2112 = vmul.f32 %v2086, %v1689
    %v2113 = vmul.f32 %v2091, %v1694
    %v2114 = vmul.f32 %v2096, %v1699
    %v2115 = vmul.f32 %v2101, %v1704
    %v2116 = vmul.f32 %v2106, %v1709
    %vm2117 = vcmp.ge.f32.partialorder %v2109, 0.0
    %vm2118 = vcmp.ge.f32.partialorder %v2110, 0.0
    %vm2119 = vcmp.ge.f32.partialorder %v2111, 0.0
    %vm2120 = vcmp.ge.f32.partialorder %v2112, 0.0
    %vm2121 = vcmp.ge.f32.partialorder %v2113, 0.0
    %vm2122 = vcmp.ge.f32.partialorder %v2114, 0.0
    %vm2123 = vcmp.ge.f32.partialorder %v2115, 0.0
    %vm2124 = vcmp.ge.f32.partialorder %v2116, 0.0
    %v2125 = vmul.f32 %v2109, 0.01
    %v2126 = vmul.f32 %v2110, 0.01
    %v2127 = vmul.f32 %v2111, 0.01
    %v2128 = vmul.f32 %v2112, 0.01
    %v2129 = vmul.f32 %v2113, 0.01
    %v2130 = vmul.f32 %v2114, 0.01
    %v2131 = vmul.f32 %v2115, 0.01
    %v2132 = vmul.f32 %v2116, 0.01
    %v2133 = vsel %vm2117, %v2109, %v2125
    %v2134 = vsel %vm2118, %v2110, %v2126
    %v2135 = vsel %vm2119, %v2111, %v2127
    %v2136 = vsel %vm2120, %v2112, %v2128
    %v2137 = vsel %vm2121, %v2113, %v2129
    %v2138 = vsel %vm2122, %v2114, %v2130
    %v2139 = vsel %vm2123, %v2115, %v2131
    %v2140 = vsel %vm2124, %v2116, %v2132
    %v2141 = vld [vmem:[#allocation2] sm:$0xff]
    %v2142 = vld [vmem:[#allocation2 + $0x8] sm:$0xff]
    %v2143 = vld [vmem:[#allocation2 + $0x10] sm:$0xff]
    %v2144 = vld [vmem:[#allocation2 + $0x18] sm:$0xff]
    %v2146 = vsel %vm367, %v1209, 0
    %v2149 = vsel %vm367, %v1210, 0
    %v2152 = vsel %vm367, %v1211, 0
    %v2155 = vsel %vm367, %v1212, 0
    %v2158 = vsel %vm367, %v1213, 0
    %v2161 = vsel %vm367, %v1214, 0
    %v2164 = vsel %vm367, %v1215, 0
    %v2167 = vsel %vm367, %v1216, 0
    %2169 = vmatprep.subr.mxu0 0.0
    %2170 = vmatpush1.msra.mxu0 %v2141
    %2171 = vmatprep.subr.mxu0 0.0
    %2172 = vmatpush1.msra.mxu0 %v2142
    %2173 = vmatprep.subr.mxu0 0.0
    %2174 = vmatpush1.msra.mxu0 %v2143
    %2175 = vmatprep.subr.mxu0 0.0
    %2176 = vmatpush1.msra.mxu0 %v2144
    %2177 = vmatprep.subr.mxu0 0.0
    %2178 = vmatpush1.msra.mxu0 0.0
    %2179 = vmatprep.subr.mxu0 0.0
    %2180 = vmatpush1.msra.mxu0 0.0
    %2181 = vmatprep.subr.mxu0 0.0
    %2182 = vmatpush1.msra.mxu0 0.0
    %2183 = vmatprep.subr.mxu0 0.0
    %2184 = vmatpush1.msra.mxu0 0.0
    %2185 = vmatprep.subr.mxu0 0.0
    %2186 = vmatpush1.msra.mxu0 0.0
    %2187 = vmatprep.subr.mxu0 0.0
    %2188 = vmatpush1.msra.mxu0 0.0
    %2189 = vmatprep.subr.mxu0 0.0
    %2190 = vmatpush1.msra.mxu0 0.0
    %2191 = vmatprep.subr.mxu0 0.0
    %2192 = vmatpush1.msra.mxu0 0.0
    %2193 = vmatprep.subr.mxu0 0.0
    %2194 = vmatpush1.msra.mxu0 0.0
    %2195 = vmatprep.subr.mxu0 0.0
    %2196 = vmatpush1.msra.mxu0 0.0
    %2197 = vmatprep.subr.mxu0 0.0
    %2198 = vmatpush1.msra.mxu0 0.0
    %2199 = vmatprep.subr.mxu0 0.0
    %2200 = vmatpush1.msra.mxu0 0.0
    %2201 = vmatprep.subr.mxu0 0.0
    %2202 = vmatpush1.msra.mxu0 0.0
    %2203 = vmatprep.subr.mxu0 0.0
    %2204 = vmatpush1.msra.mxu0 0.0
    %2205 = vmatprep.subr.mxu0 0.0
    %2206 = vmatpush1.msra.mxu0 0.0
    %2207 = vmatprep.subr.mxu0 0.0
    %2208 = vmatpush1.msra.mxu0 0.0
    %2209 = vmatprep.subr.mxu0 0.0
    %2210 = vmatpush1.msra.mxu0 0.0
    %2211 = vmatprep.subr.mxu0 0.0
    %2212 = vmatpush1.msra.mxu0 0.0
    %2213 = vmatprep.subr.mxu0 0.0
    %2214 = vmatpush1.msra.mxu0 0.0
    %2215 = vmatprep.subr.mxu0 0.0
    %2216 = vmatpush1.msra.mxu0 0.0
    %2217 = vmatprep.subr.mxu0 0.0
    %2218 = vmatpush1.msra.mxu0 0.0
    %2219 = vmatprep.subr.mxu0 0.0
    %2220 = vmatpush1.msra.mxu0 0.0
    %2221 = vmatprep.subr.mxu0 0.0
    %2222 = vmatpush1.msra.mxu0 0.0
    %2223 = vmatprep.subr.mxu0 0.0
    %2224 = vmatpush1.msra.mxu0 0.0
    %2225 = vmatprep.subr.mxu0 0.0
    %2226 = vmatpush1.msra.mxu0 0.0
    %2227 = vmatprep.subr.mxu0 0.0
    %2228 = vmatpush1.msra.mxu0 0.0
    %2229 = vmatprep.subr.mxu0 0.0
    %2230 = vmatpush1.msra.mxu0 0.0
    %2231 = vmatprep.subr.mxu0 0.0
    %2232 = vmatpush1.msra.mxu0 0.0
    %2233 = vmatprep.mubr.f32.mxu0 0.0
    %2234 = vmatmul.mubr.f32.gmra.mrb[0].mxu0 %v2146
    %v2235 = vpop.f32.mrb[0].mxu0
    %v2236 = vadd.f32 0.0, %v2235
    %v2237 = vpop.f32.mrb[0].mxu0
    %2238 = vmatprep.mubr.f32.mxu0 0.0
    %2239 = vmatmul.mubr.f32.gmra.mrb[0].mxu0 %v2149
    %v2240 = vpop.f32.mrb[0].mxu0
    %v2241 = vadd.f32 0.0, %v2240
    %v2242 = vpop.f32.mrb[0].mxu0
    %2243 = vmatprep.mubr.f32.mxu0 0.0
    %2244 = vmatmul.mubr.f32.gmra.mrb[0].mxu0 %v2152
    %v2245 = vpop.f32.mrb[0].mxu0
    %v2246 = vadd.f32 0.0, %v2245
    %v2247 = vpop.f32.mrb[0].mxu0
    %2248 = vmatprep.mubr.f32.mxu0 0.0
    %2249 = vmatmul.mubr.f32.gmra.mrb[0].mxu0 %v2155
    %v2250 = vpop.f32.mrb[0].mxu0
    %v2251 = vadd.f32 0.0, %v2250
    %v2252 = vpop.f32.mrb[0].mxu0
    %2253 = vmatprep.mubr.f32.mxu0 0.0
    %2254 = vmatmul.mubr.f32.gmra.mrb[0].mxu0 %v2158
    %v2255 = vpop.f32.mrb[0].mxu0
    %v2256 = vadd.f32 0.0, %v2255
    %v2257 = vpop.f32.mrb[0].mxu0
    %2258 = vmatprep.mubr.f32.mxu0 0.0
    %2259 = vmatmul.mubr.f32.gmra.mrb[0].mxu0 %v2161
    %v2260 = vpop.f32.mrb[0].mxu0
    %v2261 = vadd.f32 0.0, %v2260
    %v2262 = vpop.f32.mrb[0].mxu0
    %2263 = vmatprep.mubr.f32.mxu0 0.0
    %2264 = vmatmul.mubr.f32.gmra.mrb[0].mxu0 %v2164
    %v2265 = vpop.f32.mrb[0].mxu0
    %v2266 = vadd.f32 0.0, %v2265
    %v2267 = vpop.f32.mrb[0].mxu0
    %2268 = vmatprep.mubr.f32.mxu0 0.0
    %2269 = vmatmul.mubr.f32.gmra.mrb[0].mxu0 %v2167
    %v2270 = vpop.f32.mrb[0].mxu0
    %v2271 = vadd.f32 0.0, %v2270
    %v2272 = vpop.f32.mrb[0].mxu0
    %2273 = vdwg.mxu0
    %2274 = vrot.lane.b32.xlu0 %v1209, 32
    %v2275 = vpop.permute.xlu0 %2274
    %2276 = vrot.lane.b32.xlu0 %v1210, 32
    %v2277 = vpop.permute.xlu0 %2276
    %2278 = vrot.lane.b32.xlu0 %v1211, 32
    %v2279 = vpop.permute.xlu0 %2278
    %2280 = vrot.lane.b32.xlu0 %v1212, 32
    %v2281 = vpop.permute.xlu0 %2280
    %2282 = vrot.lane.b32.xlu0 %v1213, 32
    %v2283 = vpop.permute.xlu0 %2282
    %2284 = vrot.lane.b32.xlu0 %v1214, 32
    %v2285 = vpop.permute.xlu0 %2284
    %2286 = vrot.lane.b32.xlu0 %v1215, 32
    %v2287 = vpop.permute.xlu0 %2286
    %2288 = vrot.lane.b32.xlu0 %v1216, 32
    %v2289 = vpop.permute.xlu0 %2288
    %2298 = vrot.lane.b32.xlu0 %v1735, 64
    %v2299 = vpop.permute.xlu0 %2298
    %2300 = vrot.lane.b32.xlu0 %v1736, 64
    %v2301 = vpop.permute.xlu0 %2300
    %2302 = vrot.lane.b32.xlu0 %v1737, 64
    %v2303 = vpop.permute.xlu0 %2302
    %2304 = vrot.lane.b32.xlu0 %v1738, 64
    %v2305 = vpop.permute.xlu0 %2304
    %2306 = vrot.lane.b32.xlu0 %v1739, 64
    %v2307 = vpop.permute.xlu0 %2306
    %2308 = vrot.lane.b32.xlu0 %v1740, 64
    %v2309 = vpop.permute.xlu0 %2308
    %2310 = vrot.lane.b32.xlu0 %v1741, 64
    %v2311 = vpop.permute.xlu0 %2310
    %2312 = vrot.lane.b32.xlu0 %v1742, 64
    %v2313 = vpop.permute.xlu0 %2312
    %2330 = vrot.lane.b32.xlu0 %v2133, 96
    %v2331 = vpop.permute.xlu0 %2330
    %2332 = vrot.lane.b32.xlu0 %v2134, 96
    %v2333 = vpop.permute.xlu0 %2332
    %2334 = vrot.lane.b32.xlu0 %v2135, 96
    %v2335 = vpop.permute.xlu0 %2334
    %2336 = vrot.lane.b32.xlu0 %v2136, 96
    %v2337 = vpop.permute.xlu0 %2336
    %2338 = vrot.lane.b32.xlu0 %v2137, 96
    %v2339 = vpop.permute.xlu0 %2338
    %2340 = vrot.lane.b32.xlu0 %v2138, 96
    %v2341 = vpop.permute.xlu0 %2340
    %2342 = vrot.lane.b32.xlu0 %v2139, 96
    %v2343 = vpop.permute.xlu0 %2342
    %2344 = vrot.lane.b32.xlu0 %v2140, 96
    %v2345 = vpop.permute.xlu0 %2344
    %v2354 = vsel %vm367, %v811, %v2275
    %v2355 = vsel %vm367, %v812, %v2277
    %v2356 = vsel %vm367, %v813, %v2279
    %v2357 = vsel %vm367, %v814, %v2281
    %v2358 = vsel %vm367, %v815, %v2283
    %v2359 = vsel %vm367, %v816, %v2285
    %v2360 = vsel %vm367, %v817, %v2287
    %v2361 = vsel %vm367, %v818, %v2289
    %v2362 = vsel %vm82, %v2354, %v2299
    %v2363 = vsel %vm82, %v2355, %v2301
    %v2364 = vsel %vm82, %v2356, %v2303
    %v2365 = vsel %vm82, %v2357, %v2305
    %v2366 = vsel %vm82, %v2358, %v2307
    %v2367 = vsel %vm82, %v2359, %v2309
    %v2368 = vsel %vm82, %v2360, %v2311
    %v2369 = vsel %vm82, %v2361, %v2313
    %vm2370 = vcmask 785408
    %v2371 = vsel %vm2370, %v2362, %v2331
    %v2372 = vsel %vm2370, %v2363, %v2333
    %v2373 = vsel %vm2370, %v2364, %v2335
    %v2374 = vsel %vm2370, %v2365, %v2337
    %v2375 = vsel %vm2370, %v2366, %v2339
    %v2376 = vsel %vm2370, %v2367, %v2341
    %v2377 = vsel %vm2370, %v2368, %v2343
    %v2378 = vsel %vm2370, %v2369, %v2345
    %2379 = vst [vmem:[%s12] sm:$0xff] %v2371
    %2380 = vst [vmem:[%s12 + $0x8] sm:$0xff] %v2372
    %2381 = vst [vmem:[%s12 + $0x10] sm:$0xff] %v2373
    %2382 = vst [vmem:[%s12 + $0x18] sm:$0xff] %v2374
    %2383 = vst [vmem:[%s12 + $0x20] sm:$0xff] %v2375
    %2384 = vst [vmem:[%s12 + $0x28] sm:$0xff] %v2376
    %2385 = vst [vmem:[%s12 + $0x30] sm:$0xff] %v2377
    %2386 = vst [vmem:[%s12 + $0x38] sm:$0xff] %v2378
    %2387 = vst.msk [vmem:[%s13] sm:$0xff] %vm367, %v2236
    %2388 = vst.msk [vmem:[%s13 + $0x8] sm:$0xff] %vm367, %v2241
    %2389 = vst.msk [vmem:[%s13 + $0x10] sm:$0xff] %vm367, %v2246
    %2390 = vst.msk [vmem:[%s13 + $0x18] sm:$0xff] %vm367, %v2251
    %2391 = vst.msk [vmem:[%s13 + $0x20] sm:$0xff] %vm367, %v2256
    %2392 = vst.msk [vmem:[%s13 + $0x28] sm:$0xff] %vm367, %v2261
    %2393 = vst.msk [vmem:[%s13 + $0x30] sm:$0xff] %vm367, %v2266
    %2394 = vst.msk [vmem:[%s13 + $0x38] sm:$0xff] %vm367, %v2271
    %2395 = vst.msk [vmem:[%s14] sm:$0xff] %vm367, %v2133
    %2396 = vst.msk [vmem:[%s14 + $0x8] sm:$0xff] %vm367, %v2134
    %2397 = vst.msk [vmem:[%s14 + $0x10] sm:$0xff] %vm367, %v2135
    %2398 = vst.msk [vmem:[%s14 + $0x18] sm:$0xff] %vm367, %v2136
    %2399 = vst.msk [vmem:[%s14 + $0x20] sm:$0xff] %vm367, %v2137
    %2400 = vst.msk [vmem:[%s14 + $0x28] sm:$0xff] %vm367, %v2138
    %2401 = vst.msk [vmem:[%s14 + $0x30] sm:$0xff] %vm367, %v2139
    %2402 = vst.msk [vmem:[%s14 + $0x38] sm:$0xff] %vm367, %v2140
    // Predicated region
    $region54: #{gglr_forward.2} parent=1 // pred_check
      _
    $region55: #{gglr_forward.2} parent=1 // pred_check_branch
      %2404 = sbr.rel (0) target = $region57
    $region56: #{gglr_forward.2} parent=1 // pred_region
      _
    $region57: #{gglr_forward.2} parent=1 // pred_fallthru
      _
    // Predicated region
    $region58: #{gglr_forward.2} parent=1 // pred_check
      _
    $region59: #{gglr_forward.2} parent=1 // pred_check_branch
      %2406 = sbr.rel (0) target = $region61
    $region60: #{gglr_forward.2} parent=1 // pred_region
      _
    $region61: #{gglr_forward.2} parent=1 // pred_fallthru
      _
    // Predicated region
    $region62: #{gglr_forward.2} parent=1 // pred_check
      _
    $region63: #{gglr_forward.2} parent=1 // pred_check_branch
      %2408 = sbr.rel (0) target = $region65
    $region64: #{gglr_forward.2} parent=1 // pred_region
      _
    $region65: #{gglr_forward.2} parent=1 // pred_fallthru
      _
    // Predicated region
    $region66: #{gglr_forward.2} parent=1 // pred_check
      _
    $region67: #{gglr_forward.2} parent=1 // pred_check_branch
      %2410 = sbr.rel (0) target = $region69
    $region68: #{gglr_forward.2} parent=1 // pred_region
      _
    $region69: #{gglr_forward.2} parent=1 // pred_fallthru
      _
    // Predicated region
    $region70: #{gglr_forward.2} parent=1 // pred_check
      _
    $region71: #{gglr_forward.2} parent=1 // pred_check_branch
      %2412 = sbr.rel (0) target = $region73
    $region72: #{gglr_forward.2} parent=1 // pred_region
      _
    $region73: #{gglr_forward.2} parent=1 // pred_fallthru
      _
    // Predicated region
    $region74: #{gglr_forward.2} parent=1 // pred_check
      _
    $region75: #{gglr_forward.2} parent=1 // pred_check_branch
      %2414 = sbr.rel (0) target = $region77
    $region76: #{gglr_forward.2} parent=1 // pred_region
      _
    $region77: #{gglr_forward.2} parent=1 // pred_fallthru
      _
    %2415 = vsyncpa [#allocation3], 1

</llo_original>
